<compile_context>
chip_gen: v5e
topology: v5e:2x2
jax: 0.10.0
libtpu: 0.0.40
codegen_flags: <defaults>
</compile_context>

<pallas_src>
import math
import functools

import jax
import jax.numpy as jnp
from jax import lax
from jax.experimental import pallas as pl
from jax.experimental.pallas import tpu as pltpu


def _pick_tile(dim, prefs):
    """Largest preferred tile that evenly divides `dim`, else the full dim."""
    for p in prefs:
        if p <= dim and dim % p == 0:
            return p
    return dim


# -----------------------------------------------------------------------------
# Kernel 1: dense projection  y = x @ W.T   (c_attn and c_proj, bias=False)
# -----------------------------------------------------------------------------
def _linear_kernel_full_k(x_ref, w_ref, o_ref):
    # Full-K path: one complete output tile per step, single lane-dense store.
    o_ref[...] = jnp.dot(x_ref[...], w_ref[...],
                         preferred_element_type=jnp.float32).astype(o_ref.dtype)


def _linear_kernel_acc(x_ref, w_ref, o_ref, acc_ref):
    # K-split path (large K): f32 VMEM accumulator over the K grid axis.
    @pl.when(pl.program_id(2) == 0)
    def _init():
        acc_ref[...] = jnp.zeros_like(acc_ref)

    acc_ref[...] += jnp.dot(x_ref[...], w_ref[...],
                            preferred_element_type=jnp.float32)

    @pl.when(pl.program_id(2) == pl.num_programs(2) - 1)
    def _store():
        o_ref[...] = acc_ref[...].astype(o_ref.dtype)


def linear(x2d, w, *, bm=512, bn=512, bk_max=1024):
    """y = x2d @ w.T.  x2d: (M, K); w: (N, K) (PyTorch nn.Linear, bias=False)."""
    M, K = x2d.shape
    N, K2 = w.shape
    assert K == K2
    # One-time host-side transpose to (K, N): no transpose inside the kernel.
    wt = jnp.swapaxes(w, 0, 1)

    bm = _pick_tile(M, (bm, 512, 256, 128, 64, 32, 16, 8))   # sublane: mult of 8
    bn = _pick_tile(N, (bn, 512, 384, 256, 128))             # lane: mult of 128

    if K <= bk_max:
        # No K grid axis, no accumulator, no init/finalize predicates.
        grid = (M // bm, N // bn)
        return pl.pallas_call(
            _linear_kernel_full_k,
            out_shape=jax.ShapeDtypeStruct((M, N), x2d.dtype),
            grid_spec=pltpu.PrefetchScalarGridSpec(
                num_scalar_prefetch=0,
                grid=grid,
                in_specs=[
                    pl.BlockSpec((bm, K), lambda i, j: (i, 0)),
                    pl.BlockSpec((K, bn), lambda i, j: (0, j)),
                ],
                out_specs=pl.BlockSpec((bm, bn), lambda i, j: (i, j)),
            ),
            compiler_params=pltpu.CompilerParams(
                dimension_semantics=("parallel", "parallel")),
        )(x2d, wt)

    bk = _pick_tile(K, (512, 384, 256, 128))
    grid = (M // bm, N // bn, K // bk)
    return pl.pallas_call(
        _linear_kernel_acc,
        out_shape=jax.ShapeDtypeStruct((M, N), x2d.dtype),
        grid_spec=pltpu.PrefetchScalarGridSpec(
            num_scalar_prefetch=0,
            grid=grid,
            in_specs=[
                pl.BlockSpec((bm, bk), lambda i, j, k: (i, k)),
                pl.BlockSpec((bk, bn), lambda i, j, k: (k, j)),
            ],
            out_specs=pl.BlockSpec((bm, bn), lambda i, j, k: (i, j)),
            scratch_shapes=[pltpu.VMEM((bm, bn), jnp.float32)],
        ),
        compiler_params=pltpu.CompilerParams(
            dimension_semantics=("parallel", "parallel", "arbitrary")),
    )(x2d, wt)


# -----------------------------------------------------------------------------
# Kernel 2: flash-style causal attention, all heads per tile, (B, T, C) layout.
#   scores = q_h @ k_h^T * (1/sqrt(C))   (module scales by n_embd, not head_dim)
#   online softmax over kv tiles; above-diagonal kv tiles: no DMA, no compute.
# -----------------------------------------------------------------------------
def _flash_attn_kernel(q_ref, k_ref, v_ref, o_ref, m_ref, l_ref, acc_ref, *,
                       n_head, head_dim, scale, block_q, block_k):
    # q_ref: (1, block_q, C)   k_ref, v_ref: (1, block_k, C)   o_ref: (1, block_q, C)
    # m_ref, l_ref: (n_head, block_q, 1) f32
    # acc_ref:      (n_head, block_q, head_dim) f32  (per-head accumulator)
    qi = pl.program_id(1)
    ki = pl.program_id(2)

    @pl.when(ki == 0)
    def _init():
        m_ref[...] = jnp.full_like(m_ref, -jnp.inf)
        l_ref[...] = jnp.zeros_like(l_ref)
        acc_ref[...] = jnp.zeros_like(acc_ref)

    def _process(masked):
        # Fold the softmax scale into q once per tile (cheaper than scaling
        # every per-head (block_q, block_k) f32 score matrix).
        q = q_ref[0] * scale          # (block_q, C)
        k = k_ref[0]                  # (block_k, C)
        v = v_ref[0]                  # (block_k, C)

        if masked:
            # Diagonal tile only (qi == ki, block_q == block_k): col <= row.
            jr = lax.broadcasted_iota(jnp.int32, (block_q, block_k), 0)
            jc = lax.broadcasted_iota(jnp.int32, (block_q, block_k), 1)
            mask = jc <= jr

        for h in range(n_head):
            cols = slice(h * head_dim, (h + 1) * head_dim)
            qh = q[:, cols]
            kh = k[:, cols]
            vh = v[:, cols]

            # q @ k^T via dot_general on the last dims (no in-kernel transpose).
            s = lax.dot_general(qh, kh, (((1,), (1,)), ((), ())),
                                preferred_element_type=jnp.float32)
            if masked:
                s = jnp.where(mask, s, -jnp.inf)

            m_prev = m_ref[h]                                     # (block_q, 1)
            m_new = jnp.maximum(m_prev, jnp.max(s, axis=-1, keepdims=True))
            alpha = jnp.exp(m_prev - m_new)                       # (block_q, 1)
            p = jnp.exp(s - m_new)                                # (block_q, block_k) f32

            l_ref[h] = alpha * l_ref[h] + jnp.sum(p, axis=-1, keepdims=True)
            m_ref[h] = m_new
            # In-place per-head accumulator update: nothing stays live across
            # heads, no concatenates, no cross-lane layout work.
            acc_ref[h] = alpha * acc_ref[h] + jnp.dot(
                p.astype(vh.dtype), vh, preferred_element_type=jnp.float32)

    @pl.when(ki < qi)
    def _interior():
        _process(masked=False)

    @pl.when(ki == qi)
    def _diagonal():
        _process(masked=True)

    @pl.when(ki == pl.num_programs(2) - 1)
    def _finalize():
        # Per-head normalize + store into the lane-dense (1, block_q, C) output
        # tile (one masked 64-wide store per head, once per q tile).
        for h in range(n_head):
            inv_l = pl.reciprocal(l_ref[h], approx=True)          # (block_q, 1)
            o_ref[0, :, h * head_dim:(h + 1) * head_dim] = (
                acc_ref[h] * inv_l).astype(o_ref.dtype)


def flash_causal_attention(qkv, n_head, scale, *, block=256):
    """qkv: (B, T, 3C) = concat(q, k, v) along the channel dim (heads
    interleaved along C within each third).  Returns attention out (B, T, C)."""
    B, T, C3 = qkv.shape
    assert C3 % 3 == 0
    C = C3 // 3
    assert C % n_head == 0
    head_dim = C // n_head

    blk = _pick_tile(T, (block, 256, 128))   # block_q == block_k
    nq = T // blk
    grid = (B, nq, nq)

    kern = functools.partial(
        _flash_attn_kernel, n_head=n_head, head_dim=head_dim, scale=scale,
        block_q=blk, block_k=blk)

    # q / k / v are views into the same (B, T, 3C) array: last-dim block index
    # 0 / 1 / 2 — no jnp.split materialization.  The kv index_map clamps the
    # sequence block index to min(ki, qi): above-diagonal steps keep the same
    # block index, so Pallas issues no DMA for them (compute is also skipped).
    q_spec = pl.BlockSpec((1, blk, C), lambda b, qi, ki: (b, qi, 0))
    k_spec = pl.BlockSpec((1, blk, C),
                          lambda b, qi, ki: (b, jnp.minimum(ki, qi), 1))
    v_spec = pl.BlockSpec((1, blk, C),
                          lambda b, qi, ki: (b, jnp.minimum(ki, qi), 2))
    # TODO(synk): on v5e, if a profile shows exposed K/V DMA, add
    #             pipeline_mode=pl.Buffered(3) to k_spec / v_spec.

    return pl.pallas_call(
        kern,
        out_shape=jax.ShapeDtypeStruct((B, T, C), qkv.dtype),
        grid_spec=pltpu.PrefetchScalarGridSpec(
            num_scalar_prefetch=0,
            grid=grid,
            in_specs=[q_spec, k_spec, v_spec],
            out_specs=pl.BlockSpec((1, blk, C), lambda b, qi, ki: (b, qi, 0)),
            scratch_shapes=[
                pltpu.VMEM((n_head, blk, 1), jnp.float32),          # running max m
                pltpu.VMEM((n_head, blk, 1), jnp.float32),          # running sum l
                pltpu.VMEM((n_head, blk, head_dim), jnp.float32),   # per-head acc
            ],
        ),
        compiler_params=pltpu.CompilerParams(
            dimension_semantics=("parallel", "parallel", "arbitrary")),
    )(qkv, qkv, qkv)


# -----------------------------------------------------------------------------
# Module wrapper
# -----------------------------------------------------------------------------
def causal_self_attention(x, w_attn, w_proj, n_head, *,
                          compute_dtype=None, block=256):
    """x: (B, T, C); w_attn: (3C, C); w_proj: (C, C).  bias=False as in the
    module; attn_dropout / res_dropout are identity (p=0 / eval mode)."""
    B, T, C = x.shape
    assert C % n_head == 0
    dt = compute_dtype if compute_dtype is not None else x.dtype

    x_ = x.astype(dt)
    qkv = linear(x_.reshape(B * T, C), w_attn.astype(dt)).reshape(B, T, 3 * C)

    # Module scales by 1/sqrt(n_embd) (NOT 1/sqrt(head_dim)) — keep that.
    scale = 1.0 / math.sqrt(C)
    attn = flash_causal_attention(qkv, n_head, scale, block=block)   # (B, T, C)

    out = linear(attn.reshape(B * T, C), w_proj.astype(dt)).reshape(B, T, C)
    # TODO(synk): stochastic dropout (p > 0) would use pltpu.prng_seed /
    #             pltpu.prng_random_bits; identity here matches eval / p=0.
    return out.astype(x.dtype)


# -----------------------------------------------------------------------------
# Pure-JAX reference (correctness check, mirrors the PyTorch module)
# -----------------------------------------------------------------------------
def reference(x, w_attn, w_proj, n_head):
    B, T, C = x.shape
    hd = C // n_head
    qkv = x @ w_attn.T
    q, k, v = jnp.split(qkv, 3, axis=2)
    q = q.reshape(B, T, n_head, hd).transpose(0, 2, 1, 3)
    k = k.reshape(B, T, n_head, hd).transpose(0, 2, 1, 3)
    v = v.reshape(B, T, n_head, hd).transpose(0, 2, 1, 3)
    att = (q @ jnp.swapaxes(k, -1, -2)) * (1.0 / math.sqrt(C))
    mask = jnp.tril(jnp.ones((T, T), dtype=bool))
    att = jnp.where(mask[None, None], att, -jnp.inf)
    att = jax.nn.softmax(att, axis=-1)
    out = (att @ v).transpose(0, 2, 1, 3).reshape(B, T, C)
    return out @ w_proj.T


if __name__ == "__main__":
    # Small GPT-style config: large enough to exercise multi-tile M/N linear
    # tiling, several kv tiles of online softmax, the diagonal-only mask path
    # and the above-diagonal DMA-skip, but still quick to run.
    B, T, C, n_head = 2, 512, 384, 6

    key = jax.random.PRNGKey(0)
    kx, ka, kp = jax.random.split(key, 3)
    x = jax.random.normal(kx, (B, T, C), dtype=jnp.float32)
    w_attn = 0.02 * jax.random.normal(ka, (3 * C, C), dtype=jnp.float32)
    w_proj = 0.02 * jax.random.normal(kp, (C, C), dtype=jnp.float32)

    # f32 path (matches the PyTorch module's numerics).
    out = jax.block_until_ready(causal_self_attention(x, w_attn, w_proj, n_head))
    ref = reference(x, w_attn, w_proj, n_head)
    assert out.shape == (B, T, C)
    assert jnp.allclose(out, ref, atol=5e-3, rtol=5e-3), "f32 mismatch vs reference"

    # bf16 operand path (f32 softmax stats / f32 MXU accumulation).
    out_bf16 = jax.block_until_ready(
        causal_self_attention(x, w_attn, w_proj, n_head,
                              compute_dtype=jnp.bfloat16))
    assert jnp.allclose(out_bf16.astype(jnp.float32), ref, atol=5e-2, rtol=5e-2), \
        "bf16 mismatch vs reference"

    print("KERNEL_OK")
</pallas_src>

<mosaic_0001>
module attributes {stable_mosaic.version = 11 : i64} {
  func.func @_linear_kernel_full_k(%arg0: i32, %arg1: i32, %arg2: memref<512x384xf32, #tpu.memory_space<vmem>>, %arg3: memref<384x384xf32, #tpu.memory_space<vmem>>, %arg4: memref<512x384xf32, #tpu.memory_space<vmem>>) attributes {dimension_semantics = [#tpu.dimension_semantics<parallel>, #tpu.dimension_semantics<parallel>], iteration_bounds = array<i64: 2, 3>, scalar_prefetch = 0 : i64, scratch_operands = 0 : i64, tpu.core_type = #tpu.core_type<tc>, window_params = [{transform_indices = @transform_0, window_bounds = array<i64: 512, 384>}, {transform_indices = @transform_1, window_bounds = array<i64: 384, 384>}, {transform_indices = @transform_2, window_bounds = array<i64: 512, 384>}]} {
    %c0 = arith.constant 0 : index
    %c0_0 = arith.constant 0 : index
    %0 = vector.load %arg2[%c0, %c0_0] : memref<512x384xf32, #tpu.memory_space<vmem>>, vector<512x384xf32>
    %c0_1 = arith.constant 0 : index
    %c0_2 = arith.constant 0 : index
    %1 = vector.load %arg3[%c0_1, %c0_2] : memref<384x384xf32, #tpu.memory_space<vmem>>, vector<384x384xf32>
    %cst = arith.constant dense<0.000000e+00> : vector<512x384xf32>
    %2 = tpu.matmul %0, %1, %cst {dimension_numbers = #tpu.dot_dimension_numbers<[1], [0], [0], [1], [0, 0, 1, 1], [], []>} : vector<512x384xf32>, vector<384x384xf32>, vector<512x384xf32> -> vector<512x384xf32>
    %c0_3 = arith.constant 0 : index
    %c0_4 = arith.constant 0 : index
    %3 = vector.load %arg4[%c0_3, %c0_4] : memref<512x384xf32, #tpu.memory_space<vmem>>, vector<512x384xf32>
    tpu.vector_store %arg4[%c0_3, %c0_4], %2 {strides = array<i32>} : memref<512x384xf32, #tpu.memory_space<vmem>>, vector<512x384xf32>,
    return
  }
  func.func @transform_0(%arg0: i32, %arg1: i32) -> (i32, i32) {
    %c0_i32 = arith.constant 0 : i32
    %c0_i32_0 = arith.constant 0 : i32
    return %arg0, %c0_i32 : i32, i32
  }
  func.func @transform_1(%arg0: i32, %arg1: i32) -> (i32, i32) {
    %c0_i32 = arith.constant 0 : i32
    %c0_i32_0 = arith.constant 0 : i32
    return %c0_i32, %arg1 : i32, i32
  }
  func.func @transform_2(%arg0: i32, %arg1: i32) -> (i32, i32) {
    %c0_i32 = arith.constant 0 : i32
    return %arg0, %arg1 : i32, i32
  }
}

</mosaic_0001>

<llo_original>
// kernel: tpu_custom_call.1
$region0: #{tpu_custom_call.1}
  #allocation0 [shape = 'u32[]', space=smem, size = 0x4, offset = 0x4, fixed_abs, tag = 'smem constant byte address 0x4 - core index']
  #allocation1 [shape = 'u32[72,128]{1,0:T(1,128)}', space=vmem, size = 0x9000, scoped, tag = 'internal scratch']
  %s0 = inlined_call_operand.hbm [shape: f32[1024,384], index: 0, kind: input, shape index: {}]
  %s1 = inlined_call_operand.hbm [shape: f32[384,1152], index: 1, kind: input, shape index: {}]
  %s2 = inlined_call_operand.hbm [shape: f32[1024,1152], index: 2, kind: output, shape index: {}]
  %s3 = sld [smem:[#allocation0]]
  $region49: #{tpu_custom_call.1} parent=0
    _
  %s5 = ssub.s32 1, %s3
  %s6 = scalar_select 0, %s5, %s3
  $region1: #{tpu_custom_call.1} parent=0
    #allocation2 [shape = 'u8[1572864]{0}', space=vmem, size = 0x180000, scoped, tag = 'input window, operand 0']
    #allocation3 [shape = 's32[2]{0}', space=sflag, size = 0x8, scoped, tag = 'scoped memory for tpu_custom_call.1']
    #allocation4 [shape = 's32[2]{0}', space=sflag, size = 0x8, scoped, tag = 'scoped memory for tpu_custom_call.1']
    #allocation5 [shape = 'u8[1179648]{0}', space=vmem, size = 0x120000, scoped, tag = 'input window, operand 1']
    #allocation6 [shape = 's32[2]{0}', space=sflag, size = 0x8, scoped, tag = 'scoped memory for tpu_custom_call.1']
    #allocation7 [shape = 'u8[1572864]{0}', space=vmem, size = 0x180000, scoped, tag = 'output window, operand 0']
    %7 = vsyncpa [#allocation3], 0
    %s8 = scalar_lea.sflag [#allocation3], 1
    %9 = vsyncpa %s8, 0
    %10 = vsyncpa [#allocation6], 0
    %s11 = scalar_lea.sflag [#allocation6], 1
    %12 = vsyncpa %s11, 0
    %13 = vsyncpa [#allocation4], 0
    %s14 = scalar_lea.sflag [#allocation4], 1
    %15 = vsyncpa %s14, 0
    loop: start=0, step=1, limit=8
    $region2: #{tpu_custom_call.1} parent=1 // loop_pre_header
      _
    $region3: #{tpu_custom_call.1} parent=1 // loop_header
      %s17 = sphi 0, %s21
      %p18 = scmp.ge.s32.totalorder %s17, 8
      %s24 = sphi 0, %s36
      %s25 = sphi 0, %s32
      %s26 = sphi 0, %s24
      %s27 = sphi 0, %s25
      %s28 = sphi 0, %s26
      %s29 = sphi 0, %s27
      %s39 = sphi 0, %s41
      %s42 = sphi 0, %s39
      %s43 = sphi 0, %s42
      %s59 = sphi 0, %s43
      %s65 = sphi 0, %s67
      %s68 = sphi 0, %s65
      %s69 = sphi 0, %s68
      %s85 = sphi 0, %s69
      %s93 = sphi 0, %s95
      %s96 = sphi 0, %s93
      %s97 = sphi 0, %s96
      %s113 = sphi 0, %s97
    $region4: #{tpu_custom_call.1} parent=1 // loop_header_branch
      %20 = sbr.rel (%p18) target = $region8
    $region5: #{tpu_custom_call.1} parent=1 // loop_body
      %s22 = ssub.s32 %s17, 1
      %s23 = ssub.s32 %s17, 2
      %s30 = sadd.s32 1, %s25
      %p31 = scmp.ge.s32.totalorder %s30, 3
      %s32 = scalar_select %p31, 0, %s30
      %s33 = sadd.s32 1, %s24
      %s34 = scalar_select %p31, %s33, %s24
      %p35 = scmp.ge.s32.totalorder %s34, 2
      %s36 = scalar_select %p35, 0, %s34
      %s37 = ssub.s32 %s24, %s36
      %p38 = scmp.eq.s32.totalorder %s37, 0
      %s40 = sadd.s32 %s39, 1
      %s41 = scalar_select %p38, %s39, %s40
      %p44 = pneg %p38
      %p45 = scmp.eq.s32.totalorder %s17, 5
      %p46 = por %p44, %p45
      %p47 = scmp.ne.s32.totalorder %s39, %s42
      %p48 = scmp.eq.s32.totalorder %s17, 0
      %p49 = por %p47, %p48
      %p50 = scmp.ne.s32.totalorder %s39, %s42
      %p51 = scmp.eq.s32.totalorder %s22, 5
      %p52 = por %p50, %p51
      %p53 = scmp.ne.s32.totalorder %s42, %s43
      %p54 = scmp.eq.s32.totalorder %s22, 0
      %p55 = por %p53, %p54
      %p56 = scmp.ne.s32.totalorder %s42, %s43
      %p57 = scmp.eq.s32.totalorder %s23, 5
      %p58 = por %p56, %p57
      %p60 = scmp.ne.s32.totalorder %s43, %s59
      %p61 = scmp.eq.s32.totalorder %s23, 0
      %p62 = por %p60, %p61
      %s63 = ssub.s32 %s25, %s32
      %p64 = scmp.eq.s32.totalorder %s63, 0
      %s66 = sadd.s32 %s65, 1
      %s67 = scalar_select %p64, %s65, %s66
      %p70 = pneg %p64
      %p71 = scmp.eq.s32.totalorder %s17, 5
      %p72 = por %p70, %p71
      %p73 = scmp.ne.s32.totalorder %s65, %s68
      %p74 = scmp.eq.s32.totalorder %s17, 0
      %p75 = por %p73, %p74
      %p76 = scmp.ne.s32.totalorder %s65, %s68
      %p77 = scmp.eq.s32.totalorder %s22, 5
      %p78 = por %p76, %p77
      %p79 = scmp.ne.s32.totalorder %s68, %s69
      %p80 = scmp.eq.s32.totalorder %s22, 0
      %p81 = por %p79, %p80
      %p82 = scmp.ne.s32.totalorder %s68, %s69
      %p83 = scmp.eq.s32.totalorder %s23, 5
      %p84 = por %p82, %p83
      %p86 = scmp.ne.s32.totalorder %s69, %s85
      %p87 = scmp.eq.s32.totalorder %s23, 0
      %p88 = por %p86, %p87
      %s89 = ssub.s32 %s24, %s36
      %s90 = ssub.s32 %s25, %s32
      %s91 = sor.u32 %s89, %s90
      %p92 = scmp.eq.s32.totalorder %s91, 0
      %s94 = sadd.s32 %s93, 1
      %s95 = scalar_select %p92, %s93, %s94
      %p98 = pneg %p92
      %p99 = scmp.eq.s32.totalorder %s17, 5
      %p100 = por %p98, %p99
      %p101 = scmp.ne.s32.totalorder %s93, %s96
      %p102 = scmp.eq.s32.totalorder %s17, 0
      %p103 = por %p101, %p102
      %p104 = scmp.ne.s32.totalorder %s93, %s96
      %p105 = scmp.eq.s32.totalorder %s22, 5
      %p106 = por %p104, %p105
      %p107 = scmp.ne.s32.totalorder %s96, %s97
      %p108 = scmp.eq.s32.totalorder %s22, 0
      %p109 = por %p107, %p108
      %p110 = scmp.ne.s32.totalorder %s96, %s97
      %p111 = scmp.eq.s32.totalorder %s23, 5
      %p112 = por %p110, %p111
      %p114 = scmp.ne.s32.totalorder %s97, %s113
      %p115 = scmp.eq.s32.totalorder %s23, 0
      %p116 = por %p114, %p115
      %p117 = scmp.le.s32.totalorder 1, %s17
      %p118 = scmp.lt.s32.totalorder %s17, 7
      %p119 = pnand %p117, %p118
      %p120 = pneg %p119
      // Predicated region
      $region9: #{tpu_custom_call.1} parent=5 // pred_check
        _
      $region10: #{tpu_custom_call.1} parent=5 // pred_check_branch
        %122 = sbr.rel (%p119) target = $region12
      $region11: #{tpu_custom_call.1} parent=5 // pred_region
        %s123 = ssub.s32 %s17, 1
      $region12: #{tpu_custom_call.1} parent=5 // pred_fallthru
        _
      %p124 = scmp.lt.s32.totalorder %s17, 6
      // Predicated region
      $region13: #{tpu_custom_call.1} parent=5 // pred_check
        %p125 = pneg %p124
      $region14: #{tpu_custom_call.1} parent=5 // pred_check_branch
        %127 = sbr.rel (%p125) target = $region16
      $region15: #{tpu_custom_call.1} parent=5 // pred_region
        // Predicated region
        $region17: #{tpu_custom_call.1} parent=15 // pred_check
          %p128 = pneg %p49
        $region18: #{tpu_custom_call.1} parent=15 // pred_check_branch
          %130 = sbr.rel (%p128) target = $region20
        $region19: #{tpu_custom_call.1} parent=15 // pred_region
          %s131 = sand.u32 %s39, 1
          %s132 = scalar_lea.sflag [#allocation3], %s131
          %s133 = sand.u32 %s39, 1
          %s134 = smul.addr %s133, 1536
          %s135 = scalar_lea.vmem [#allocation2], %s134
          %s136 = smul.u32 64, %s24
          %138 = vsyncadd %s132, 0
          %s139 = smul.addr %s136, 3
          %s140 = smul.addr %s139, 8
          %s141 = scalar_lea.hbm %s0, %s140
          %s142 = sshll.u32 %s141, 4
          %s143 = int_to_ptr.hbm [resolvable:$true] %s142
          %s144 = sshll.u32 %s135, 4
          %s145 = int_to_ptr.vmem [resolvable:$true] %s144
          %150 = dma.hbm_to_vmem [thread:$0]  %s143, 24576, %s145, %s132, 384, 384, 24
        $region20: #{tpu_custom_call.1} parent=15 // pred_fallthru
          _
        // Predicated region
        $region21: #{tpu_custom_call.1} parent=15 // pred_check
          %p151 = pneg %p75
        $region22: #{tpu_custom_call.1} parent=15 // pred_check_branch
          %153 = sbr.rel (%p151) target = $region24
        $region23: #{tpu_custom_call.1} parent=15 // pred_region
          %s154 = sand.u32 %s65, 1
          %s155 = scalar_lea.sflag [#allocation6], %s154
          %s156 = sand.u32 %s65, 1
          %s157 = smul.addr %s156, 1152
          %s158 = scalar_lea.vmem [#allocation5], %s157
          %s159 = smul.u32 3, %s25
          %161 = vsyncadd %s155, 0
          %s162 = smul.addr %s159, 8
          %s163 = scalar_lea.hbm %s1, %s162
          %s164 = sshll.u32 %s163, 4
          %s165 = int_to_ptr.hbm [resolvable:$true] %s164
          %s166 = sshll.u32 %s158, 4
          %s167 = int_to_ptr.vmem [resolvable:$true] %s166
          %172 = dma.hbm_to_vmem [thread:$0]  %s165, 18432, %s167, %s155, 1152, 384, 24
        $region24: #{tpu_custom_call.1} parent=15 // pred_fallthru
          _
      $region16: #{tpu_custom_call.1} parent=5 // pred_fallthru
        _
      %p173 = scmp.le.s32.totalorder 1, %s17
      %p174 = scmp.lt.s32.totalorder %s17, 7
      %p175 = pnand %p173, %p174
      %p176 = pneg %p175
      // Predicated region
      $region25: #{tpu_custom_call.1} parent=5 // pred_check
        _
      $region26: #{tpu_custom_call.1} parent=5 // pred_check_branch
        %178 = sbr.rel (%p175) target = $region28
      $region27: #{tpu_custom_call.1} parent=5 // pred_region
        %s179 = ssub.s32 %s17, 1
        %s180 = sand.u32 %s42, 1
        %s181 = scalar_lea.sflag [#allocation3], %s180
        %s182 = sand.u32 %s42, 1
        %s183 = smul.addr %s182, 1536
        %s184 = scalar_lea.vmem [#allocation2], %s183
        // Predicated region
        $region29: #{tpu_custom_call.1} parent=27 // pred_check
          %p185 = pneg %p55
        $region30: #{tpu_custom_call.1} parent=27 // pred_check_branch
          %187 = sbr.rel (%p185) target = $region32
        $region31: #{tpu_custom_call.1} parent=27 // pred_region
          %189 = dma.done %s181, 24576
        $region32: #{tpu_custom_call.1} parent=27 // pred_fallthru
          _
        %s190 = sand.u32 %s68, 1
        %s191 = scalar_lea.sflag [#allocation6], %s190
        %s192 = sand.u32 %s68, 1
        %s193 = smul.addr %s192, 1152
        %s194 = scalar_lea.vmem [#allocation5], %s193
        // Predicated region
        $region33: #{tpu_custom_call.1} parent=27 // pred_check
          %p195 = pneg %p81
        $region34: #{tpu_custom_call.1} parent=27 // pred_check_branch
          %197 = sbr.rel (%p195) target = $region36
        $region35: #{tpu_custom_call.1} parent=27 // pred_region
          %199 = dma.done %s191, 18432
        $region36: #{tpu_custom_call.1} parent=27 // pred_fallthru
          _
        %s200 = sand.u32 %s42, 1
        %s201 = scalar_lea.sflag [#allocation3], %s200
        %s202 = sand.u32 %s42, 1
        %s203 = smul.addr %s202, 1536
        %s204 = scalar_lea.vmem [#allocation2], %s203
        %p205 = pneg %p55
        %p206 = pneg %p52
        %s207 = sand.u32 %s68, 1
        %s208 = scalar_lea.sflag [#allocation6], %s207
        %s209 = sand.u32 %s68, 1
        %s210 = smul.addr %s209, 1152
        %s211 = scalar_lea.vmem [#allocation5], %s210
        %p212 = pneg %p81
        %p213 = pneg %p78
        %p214 = pneg %p109
        %p215 = pneg %p106
        %s216 = sand.u32 %s96, 1
        %s217 = scalar_lea.sflag [#allocation4], %s216
        %s218 = sand.u32 %s96, 1
        %s219 = smul.addr %s218, 1536
        %s220 = scalar_lea.vmem [#allocation7], %s219
        %s221 = smul.u32 64, %s26
        %s222 = smul.u32 3, %s27
        %s223 = smul.u32 64, %s26
        %s224 = smul.u32 3, %s27
        %v225 = vld [vmem:[%s184] sm:$0xff]
        %v226 = vld [vmem:[%s184 + $0x8] sm:$0xff]
        %v227 = vld [vmem:[%s184 + $0x10] sm:$0xff]
        %v228 = vld [vmem:[%s184 + $0x18] sm:$0xff]
        %v229 = vld [vmem:[%s184 + $0x20] sm:$0xff]
        %v230 = vld [vmem:[%s184 + $0x28] sm:$0xff]
        %v231 = vld [vmem:[%s184 + $0x30] sm:$0xff]
        %v232 = vld [vmem:[%s184 + $0x38] sm:$0xff]
        %v233 = vld [vmem:[%s184 + $0x40] sm:$0xff]
        %v234 = vld [vmem:[%s184 + $0x48] sm:$0xff]
        %v235 = vld [vmem:[%s184 + $0x50] sm:$0xff]
        %v236 = vld [vmem:[%s184 + $0x58] sm:$0xff]
        %v237 = vld [vmem:[%s184 + $0x60] sm:$0xff]
        %v238 = vld [vmem:[%s184 + $0x68] sm:$0xff]
        %v239 = vld [vmem:[%s184 + $0x70] sm:$0xff]
        %v240 = vld [vmem:[%s184 + $0x78] sm:$0xff]
        %v241 = vld [vmem:[%s184 + $0x80] sm:$0xff]
        %v242 = vld [vmem:[%s184 + $0x88] sm:$0xff]
        %v243 = vld [vmem:[%s184 + $0x90] sm:$0xff]
        %v244 = vld [vmem:[%s184 + $0x98] sm:$0xff]
        %v245 = vld [vmem:[%s184 + $0xa0] sm:$0xff]
        %v246 = vld [vmem:[%s184 + $0xa8] sm:$0xff]
        %v247 = vld [vmem:[%s184 + $0xb0] sm:$0xff]
        %v248 = vld [vmem:[%s184 + $0xb8] sm:$0xff]
        %v249 = vld [vmem:[%s184 + $0xc0] sm:$0xff]
        %v250 = vld [vmem:[%s184 + $0xc8] sm:$0xff]
        %v251 = vld [vmem:[%s184 + $0xd0] sm:$0xff]
        %v252 = vld [vmem:[%s184 + $0xd8] sm:$0xff]
        %v253 = vld [vmem:[%s184 + $0xe0] sm:$0xff]
        %v254 = vld [vmem:[%s184 + $0xe8] sm:$0xff]
        %v255 = vld [vmem:[%s184 + $0xf0] sm:$0xff]
        %v256 = vld [vmem:[%s184 + $0xf8] sm:$0xff]
        %v257 = vld [vmem:[%s184 + $0x100] sm:$0xff]
        %v258 = vld [vmem:[%s184 + $0x108] sm:$0xff]
        %v259 = vld [vmem:[%s184 + $0x110] sm:$0xff]
        %v260 = vld [vmem:[%s184 + $0x118] sm:$0xff]
        %v261 = vld [vmem:[%s184 + $0x120] sm:$0xff]
        %v262 = vld [vmem:[%s184 + $0x128] sm:$0xff]
        %v263 = vld [vmem:[%s184 + $0x130] sm:$0xff]
        %v264 = vld [vmem:[%s184 + $0x138] sm:$0xff]
        %v265 = vld [vmem:[%s184 + $0x140] sm:$0xff]
        %v266 = vld [vmem:[%s184 + $0x148] sm:$0xff]
        %v267 = vld [vmem:[%s184 + $0x150] sm:$0xff]
        %v268 = vld [vmem:[%s184 + $0x158] sm:$0xff]
        %v269 = vld [vmem:[%s184 + $0x160] sm:$0xff]
        %v270 = vld [vmem:[%s184 + $0x168] sm:$0xff]
        %v271 = vld [vmem:[%s184 + $0x170] sm:$0xff]
        %v272 = vld [vmem:[%s184 + $0x178] sm:$0xff]
        %v273 = vld [vmem:[%s184 + $0x180] sm:$0xff]
        %v274 = vld [vmem:[%s184 + $0x188] sm:$0xff]
        %v275 = vld [vmem:[%s184 + $0x190] sm:$0xff]
        %v276 = vld [vmem:[%s184 + $0x198] sm:$0xff]
        %v277 = vld [vmem:[%s184 + $0x1a0] sm:$0xff]
        %v278 = vld [vmem:[%s184 + $0x1a8] sm:$0xff]
        %v279 = vld [vmem:[%s184 + $0x1b0] sm:$0xff]
        %v280 = vld [vmem:[%s184 + $0x1b8] sm:$0xff]
        %v281 = vld [vmem:[%s184 + $0x1c0] sm:$0xff]
        %v282 = vld [vmem:[%s184 + $0x1c8] sm:$0xff]
        %v283 = vld [vmem:[%s184 + $0x1d0] sm:$0xff]
        %v284 = vld [vmem:[%s184 + $0x1d8] sm:$0xff]
        %v285 = vld [vmem:[%s184 + $0x1e0] sm:$0xff]
        %v286 = vld [vmem:[%s184 + $0x1e8] sm:$0xff]
        %v287 = vld [vmem:[%s184 + $0x1f0] sm:$0xff]
        %v288 = vld [vmem:[%s184 + $0x1f8] sm:$0xff]
        %v289 = vld [vmem:[%s184 + $0x200] sm:$0xff]
        %v290 = vld [vmem:[%s184 + $0x208] sm:$0xff]
        %v291 = vld [vmem:[%s184 + $0x210] sm:$0xff]
        %v292 = vld [vmem:[%s184 + $0x218] sm:$0xff]
        %v293 = vld [vmem:[%s184 + $0x220] sm:$0xff]
        %v294 = vld [vmem:[%s184 + $0x228] sm:$0xff]
        %v295 = vld [vmem:[%s184 + $0x230] sm:$0xff]
        %v296 = vld [vmem:[%s184 + $0x238] sm:$0xff]
        %v297 = vld [vmem:[%s184 + $0x240] sm:$0xff]
        %v298 = vld [vmem:[%s184 + $0x248] sm:$0xff]
        %v299 = vld [vmem:[%s184 + $0x250] sm:$0xff]
        %v300 = vld [vmem:[%s184 + $0x258] sm:$0xff]
        %v301 = vld [vmem:[%s184 + $0x260] sm:$0xff]
        %v302 = vld [vmem:[%s184 + $0x268] sm:$0xff]
        %v303 = vld [vmem:[%s184 + $0x270] sm:$0xff]
        %v304 = vld [vmem:[%s184 + $0x278] sm:$0xff]
        %v305 = vld [vmem:[%s184 + $0x280] sm:$0xff]
        %v306 = vld [vmem:[%s184 + $0x288] sm:$0xff]
        %v307 = vld [vmem:[%s184 + $0x290] sm:$0xff]
        %v308 = vld [vmem:[%s184 + $0x298] sm:$0xff]
        %v309 = vld [vmem:[%s184 + $0x2a0] sm:$0xff]
        %v310 = vld [vmem:[%s184 + $0x2a8] sm:$0xff]
        %v311 = vld [vmem:[%s184 + $0x2b0] sm:$0xff]
        %v312 = vld [vmem:[%s184 + $0x2b8] sm:$0xff]
        %v313 = vld [vmem:[%s184 + $0x2c0] sm:$0xff]
        %v314 = vld [vmem:[%s184 + $0x2c8] sm:$0xff]
        %v315 = vld [vmem:[%s184 + $0x2d0] sm:$0xff]
        %v316 = vld [vmem:[%s184 + $0x2d8] sm:$0xff]
        %v317 = vld [vmem:[%s184 + $0x2e0] sm:$0xff]
        %v318 = vld [vmem:[%s184 + $0x2e8] sm:$0xff]
        %v319 = vld [vmem:[%s184 + $0x2f0] sm:$0xff]
        %v320 = vld [vmem:[%s184 + $0x2f8] sm:$0xff]
        %v321 = vld [vmem:[%s184 + $0x300] sm:$0xff]
        %v322 = vld [vmem:[%s184 + $0x308] sm:$0xff]
        %v323 = vld [vmem:[%s184 + $0x310] sm:$0xff]
        %v324 = vld [vmem:[%s184 + $0x318] sm:$0xff]
        %v325 = vld [vmem:[%s184 + $0x320] sm:$0xff]
        %v326 = vld [vmem:[%s184 + $0x328] sm:$0xff]
        %v327 = vld [vmem:[%s184 + $0x330] sm:$0xff]
        %v328 = vld [vmem:[%s184 + $0x338] sm:$0xff]
        %v329 = vld [vmem:[%s184 + $0x340] sm:$0xff]
        %v330 = vld [vmem:[%s184 + $0x348] sm:$0xff]
        %v331 = vld [vmem:[%s184 + $0x350] sm:$0xff]
        %v332 = vld [vmem:[%s184 + $0x358] sm:$0xff]
        %v333 = vld [vmem:[%s184 + $0x360] sm:$0xff]
        %v334 = vld [vmem:[%s184 + $0x368] sm:$0xff]
        %v335 = vld [vmem:[%s184 + $0x370] sm:$0xff]
        %v336 = vld [vmem:[%s184 + $0x378] sm:$0xff]
        %v337 = vld [vmem:[%s184 + $0x380] sm:$0xff]
        %v338 = vld [vmem:[%s184 + $0x388] sm:$0xff]
        %v339 = vld [vmem:[%s184 + $0x390] sm:$0xff]
        %v340 = vld [vmem:[%s184 + $0x398] sm:$0xff]
        %v341 = vld [vmem:[%s184 + $0x3a0] sm:$0xff]
        %v342 = vld [vmem:[%s184 + $0x3a8] sm:$0xff]
        %v343 = vld [vmem:[%s184 + $0x3b0] sm:$0xff]
        %v344 = vld [vmem:[%s184 + $0x3b8] sm:$0xff]
        %v345 = vld [vmem:[%s184 + $0x3c0] sm:$0xff]
        %v346 = vld [vmem:[%s184 + $0x3c8] sm:$0xff]
        %v347 = vld [vmem:[%s184 + $0x3d0] sm:$0xff]
        %v348 = vld [vmem:[%s184 + $0x3d8] sm:$0xff]
        %v349 = vld [vmem:[%s184 + $0x3e0] sm:$0xff]
        %v350 = vld [vmem:[%s184 + $0x3e8] sm:$0xff]
        %v351 = vld [vmem:[%s184 + $0x3f0] sm:$0xff]
        %v352 = vld [vmem:[%s184 + $0x3f8] sm:$0xff]
        %v353 = vld [vmem:[%s184 + $0x400] sm:$0xff]
        %v354 = vld [vmem:[%s184 + $0x408] sm:$0xff]
        %v355 = vld [vmem:[%s184 + $0x410] sm:$0xff]
        %v356 = vld [vmem:[%s184 + $0x418] sm:$0xff]
        %v357 = vld [vmem:[%s184 + $0x420] sm:$0xff]
        %v358 = vld [vmem:[%s184 + $0x428] sm:$0xff]
        %v359 = vld [vmem:[%s184 + $0x430] sm:$0xff]
        %v360 = vld [vmem:[%s184 + $0x438] sm:$0xff]
        %v361 = vld [vmem:[%s184 + $0x440] sm:$0xff]
        %v362 = vld [vmem:[%s184 + $0x448] sm:$0xff]
        %v363 = vld [vmem:[%s184 + $0x450] sm:$0xff]
        %v364 = vld [vmem:[%s184 + $0x458] sm:$0xff]
        %v365 = vld [vmem:[%s184 + $0x460] sm:$0xff]
        %v366 = vld [vmem:[%s184 + $0x468] sm:$0xff]
        %v367 = vld [vmem:[%s184 + $0x470] sm:$0xff]
        %v368 = vld [vmem:[%s184 + $0x478] sm:$0xff]
        %v369 = vld [vmem:[%s184 + $0x480] sm:$0xff]
        %v370 = vld [vmem:[%s184 + $0x488] sm:$0xff]
        %v371 = vld [vmem:[%s184 + $0x490] sm:$0xff]
        %v372 = vld [vmem:[%s184 + $0x498] sm:$0xff]
        %v373 = vld [vmem:[%s184 + $0x4a0] sm:$0xff]
        %v374 = vld [vmem:[%s184 + $0x4a8] sm:$0xff]
        %v375 = vld [vmem:[%s184 + $0x4b0] sm:$0xff]
        %v376 = vld [vmem:[%s184 + $0x4b8] sm:$0xff]
        %v377 = vld [vmem:[%s184 + $0x4c0] sm:$0xff]
        %v378 = vld [vmem:[%s184 + $0x4c8] sm:$0xff]
        %v379 = vld [vmem:[%s184 + $0x4d0] sm:$0xff]
        %v380 = vld [vmem:[%s184 + $0x4d8] sm:$0xff]
        %v381 = vld [vmem:[%s184 + $0x4e0] sm:$0xff]
        %v382 = vld [vmem:[%s184 + $0x4e8] sm:$0xff]
        %v383 = vld [vmem:[%s184 + $0x4f0] sm:$0xff]
        %v384 = vld [vmem:[%s184 + $0x4f8] sm:$0xff]
        %v385 = vld [vmem:[%s184 + $0x500] sm:$0xff]
        %v386 = vld [vmem:[%s184 + $0x508] sm:$0xff]
        %v387 = vld [vmem:[%s184 + $0x510] sm:$0xff]
        %v388 = vld [vmem:[%s184 + $0x518] sm:$0xff]
        %v389 = vld [vmem:[%s184 + $0x520] sm:$0xff]
        %v390 = vld [vmem:[%s184 + $0x528] sm:$0xff]
        %v391 = vld [vmem:[%s184 + $0x530] sm:$0xff]
        %v392 = vld [vmem:[%s184 + $0x538] sm:$0xff]
        %v393 = vld [vmem:[%s184 + $0x540] sm:$0xff]
        %v394 = vld [vmem:[%s184 + $0x548] sm:$0xff]
        %v395 = vld [vmem:[%s184 + $0x550] sm:$0xff]
        %v396 = vld [vmem:[%s184 + $0x558] sm:$0xff]
        %v397 = vld [vmem:[%s184 + $0x560] sm:$0xff]
        %v398 = vld [vmem:[%s184 + $0x568] sm:$0xff]
        %v399 = vld [vmem:[%s184 + $0x570] sm:$0xff]
        %v400 = vld [vmem:[%s184 + $0x578] sm:$0xff]
        %v401 = vld [vmem:[%s184 + $0x580] sm:$0xff]
        %v402 = vld [vmem:[%s184 + $0x588] sm:$0xff]
        %v403 = vld [vmem:[%s184 + $0x590] sm:$0xff]
        %v404 = vld [vmem:[%s184 + $0x598] sm:$0xff]
        %v405 = vld [vmem:[%s184 + $0x5a0] sm:$0xff]
        %v406 = vld [vmem:[%s184 + $0x5a8] sm:$0xff]
        %v407 = vld [vmem:[%s184 + $0x5b0] sm:$0xff]
        %v408 = vld [vmem:[%s184 + $0x5b8] sm:$0xff]
        %v409 = vld [vmem:[%s184 + $0x5c0] sm:$0xff]
        %v410 = vld [vmem:[%s184 + $0x5c8] sm:$0xff]
        %v411 = vld [vmem:[%s184 + $0x5d0] sm:$0xff]
        %v412 = vld [vmem:[%s184 + $0x5d8] sm:$0xff]
        %v413 = vld [vmem:[%s184 + $0x5e0] sm:$0xff]
        %v414 = vld [vmem:[%s184 + $0x5e8] sm:$0xff]
        %v415 = vld [vmem:[%s184 + $0x5f0] sm:$0xff]
        %v416 = vld [vmem:[%s184 + $0x5f8] sm:$0xff]
        %v417 = vld [vmem:[%s194] sm:$0xff]
        %v418 = vld [vmem:[%s194 + $0x8] sm:$0xff]
        %v419 = vld [vmem:[%s194 + $0x10] sm:$0xff]
        %v420 = vld [vmem:[%s194 + $0x18] sm:$0xff]
        %v421 = vld [vmem:[%s194 + $0x20] sm:$0xff]
        %v422 = vld [vmem:[%s194 + $0x28] sm:$0xff]
        %v423 = vld [vmem:[%s194 + $0x30] sm:$0xff]
        %v424 = vld [vmem:[%s194 + $0x38] sm:$0xff]
        %v425 = vld [vmem:[%s194 + $0x40] sm:$0xff]
        %v426 = vld [vmem:[%s194 + $0x48] sm:$0xff]
        %v427 = vld [vmem:[%s194 + $0x50] sm:$0xff]
        %v428 = vld [vmem:[%s194 + $0x58] sm:$0xff]
        %v429 = vld [vmem:[%s194 + $0x60] sm:$0xff]
        %v430 = vld [vmem:[%s194 + $0x68] sm:$0xff]
        %v431 = vld [vmem:[%s194 + $0x70] sm:$0xff]
        %v432 = vld [vmem:[%s194 + $0x78] sm:$0xff]
        %v433 = vld [vmem:[%s194 + $0x80] sm:$0xff]
        %v434 = vld [vmem:[%s194 + $0x88] sm:$0xff]
        %v435 = vld [vmem:[%s194 + $0x90] sm:$0xff]
        %v436 = vld [vmem:[%s194 + $0x98] sm:$0xff]
        %v437 = vld [vmem:[%s194 + $0xa0] sm:$0xff]
        %v438 = vld [vmem:[%s194 + $0xa8] sm:$0xff]
        %v439 = vld [vmem:[%s194 + $0xb0] sm:$0xff]
        %v440 = vld [vmem:[%s194 + $0xb8] sm:$0xff]
        %v441 = vld [vmem:[%s194 + $0xc0] sm:$0xff]
        %v442 = vld [vmem:[%s194 + $0xc8] sm:$0xff]
        %v443 = vld [vmem:[%s194 + $0xd0] sm:$0xff]
        %v444 = vld [vmem:[%s194 + $0xd8] sm:$0xff]
        %v445 = vld [vmem:[%s194 + $0xe0] sm:$0xff]
        %v446 = vld [vmem:[%s194 + $0xe8] sm:$0xff]
        %v447 = vld [vmem:[%s194 + $0xf0] sm:$0xff]
        %v448 = vld [vmem:[%s194 + $0xf8] sm:$0xff]
        %v449 = vld [vmem:[%s194 + $0x100] sm:$0xff]
        %v450 = vld [vmem:[%s194 + $0x108] sm:$0xff]
        %v451 = vld [vmem:[%s194 + $0x110] sm:$0xff]
        %v452 = vld [vmem:[%s194 + $0x118] sm:$0xff]
        %v453 = vld [vmem:[%s194 + $0x120] sm:$0xff]
        %v454 = vld [vmem:[%s194 + $0x128] sm:$0xff]
        %v455 = vld [vmem:[%s194 + $0x130] sm:$0xff]
        %v456 = vld [vmem:[%s194 + $0x138] sm:$0xff]
        %v457 = vld [vmem:[%s194 + $0x140] sm:$0xff]
        %v458 = vld [vmem:[%s194 + $0x148] sm:$0xff]
        %v459 = vld [vmem:[%s194 + $0x150] sm:$0xff]
        %v460 = vld [vmem:[%s194 + $0x158] sm:$0xff]
        %v461 = vld [vmem:[%s194 + $0x160] sm:$0xff]
        %v462 = vld [vmem:[%s194 + $0x168] sm:$0xff]
        %v463 = vld [vmem:[%s194 + $0x170] sm:$0xff]
        %v464 = vld [vmem:[%s194 + $0x178] sm:$0xff]
        %v465 = vld [vmem:[%s194 + $0x180] sm:$0xff]
        %v466 = vld [vmem:[%s194 + $0x188] sm:$0xff]
        %v467 = vld [vmem:[%s194 + $0x190] sm:$0xff]
        %v468 = vld [vmem:[%s194 + $0x198] sm:$0xff]
        %v469 = vld [vmem:[%s194 + $0x1a0] sm:$0xff]
        %v470 = vld [vmem:[%s194 + $0x1a8] sm:$0xff]
        %v471 = vld [vmem:[%s194 + $0x1b0] sm:$0xff]
        %v472 = vld [vmem:[%s194 + $0x1b8] sm:$0xff]
        %v473 = vld [vmem:[%s194 + $0x1c0] sm:$0xff]
        %v474 = vld [vmem:[%s194 + $0x1c8] sm:$0xff]
        %v475 = vld [vmem:[%s194 + $0x1d0] sm:$0xff]
        %v476 = vld [vmem:[%s194 + $0x1d8] sm:$0xff]
        %v477 = vld [vmem:[%s194 + $0x1e0] sm:$0xff]
        %v478 = vld [vmem:[%s194 + $0x1e8] sm:$0xff]
        %v479 = vld [vmem:[%s194 + $0x1f0] sm:$0xff]
        %v480 = vld [vmem:[%s194 + $0x1f8] sm:$0xff]
        %v481 = vld [vmem:[%s194 + $0x200] sm:$0xff]
        %v482 = vld [vmem:[%s194 + $0x208] sm:$0xff]
        %v483 = vld [vmem:[%s194 + $0x210] sm:$0xff]
        %v484 = vld [vmem:[%s194 + $0x218] sm:$0xff]
        %v485 = vld [vmem:[%s194 + $0x220] sm:$0xff]
        %v486 = vld [vmem:[%s194 + $0x228] sm:$0xff]
        %v487 = vld [vmem:[%s194 + $0x230] sm:$0xff]
        %v488 = vld [vmem:[%s194 + $0x238] sm:$0xff]
        %v489 = vld [vmem:[%s194 + $0x240] sm:$0xff]
        %v490 = vld [vmem:[%s194 + $0x248] sm:$0xff]
        %v491 = vld [vmem:[%s194 + $0x250] sm:$0xff]
        %v492 = vld [vmem:[%s194 + $0x258] sm:$0xff]
        %v493 = vld [vmem:[%s194 + $0x260] sm:$0xff]
        %v494 = vld [vmem:[%s194 + $0x268] sm:$0xff]
        %v495 = vld [vmem:[%s194 + $0x270] sm:$0xff]
        %v496 = vld [vmem:[%s194 + $0x278] sm:$0xff]
        %v497 = vld [vmem:[%s194 + $0x280] sm:$0xff]
        %v498 = vld [vmem:[%s194 + $0x288] sm:$0xff]
        %v499 = vld [vmem:[%s194 + $0x290] sm:$0xff]
        %v500 = vld [vmem:[%s194 + $0x298] sm:$0xff]
        %v501 = vld [vmem:[%s194 + $0x2a0] sm:$0xff]
        %v502 = vld [vmem:[%s194 + $0x2a8] sm:$0xff]
        %v503 = vld [vmem:[%s194 + $0x2b0] sm:$0xff]
        %v504 = vld [vmem:[%s194 + $0x2b8] sm:$0xff]
        %v505 = vld [vmem:[%s194 + $0x2c0] sm:$0xff]
        %v506 = vld [vmem:[%s194 + $0x2c8] sm:$0xff]
        %v507 = vld [vmem:[%s194 + $0x2d0] sm:$0xff]
        %v508 = vld [vmem:[%s194 + $0x2d8] sm:$0xff]
        %v509 = vld [vmem:[%s194 + $0x2e0] sm:$0xff]
        %v510 = vld [vmem:[%s194 + $0x2e8] sm:$0xff]
        %v511 = vld [vmem:[%s194 + $0x2f0] sm:$0xff]
        %v512 = vld [vmem:[%s194 + $0x2f8] sm:$0xff]
        %v513 = vld [vmem:[%s194 + $0x300] sm:$0xff]
        %v514 = vld [vmem:[%s194 + $0x308] sm:$0xff]
        %v515 = vld [vmem:[%s194 + $0x310] sm:$0xff]
        %v516 = vld [vmem:[%s194 + $0x318] sm:$0xff]
        %v517 = vld [vmem:[%s194 + $0x320] sm:$0xff]
        %v518 = vld [vmem:[%s194 + $0x328] sm:$0xff]
        %v519 = vld [vmem:[%s194 + $0x330] sm:$0xff]
        %v520 = vld [vmem:[%s194 + $0x338] sm:$0xff]
        %v521 = vld [vmem:[%s194 + $0x340] sm:$0xff]
        %v522 = vld [vmem:[%s194 + $0x348] sm:$0xff]
        %v523 = vld [vmem:[%s194 + $0x350] sm:$0xff]
        %v524 = vld [vmem:[%s194 + $0x358] sm:$0xff]
        %v525 = vld [vmem:[%s194 + $0x360] sm:$0xff]
        %v526 = vld [vmem:[%s194 + $0x368] sm:$0xff]
        %v527 = vld [vmem:[%s194 + $0x370] sm:$0xff]
        %v528 = vld [vmem:[%s194 + $0x378] sm:$0xff]
        %v529 = vld [vmem:[%s194 + $0x380] sm:$0xff]
        %v530 = vld [vmem:[%s194 + $0x388] sm:$0xff]
        %v531 = vld [vmem:[%s194 + $0x390] sm:$0xff]
        %v532 = vld [vmem:[%s194 + $0x398] sm:$0xff]
        %v533 = vld [vmem:[%s194 + $0x3a0] sm:$0xff]
        %v534 = vld [vmem:[%s194 + $0x3a8] sm:$0xff]
        %v535 = vld [vmem:[%s194 + $0x3b0] sm:$0xff]
        %v536 = vld [vmem:[%s194 + $0x3b8] sm:$0xff]
        %v537 = vld [vmem:[%s194 + $0x3c0] sm:$0xff]
        %v538 = vld [vmem:[%s194 + $0x3c8] sm:$0xff]
        %v539 = vld [vmem:[%s194 + $0x3d0] sm:$0xff]
        %v540 = vld [vmem:[%s194 + $0x3d8] sm:$0xff]
        %v541 = vld [vmem:[%s194 + $0x3e0] sm:$0xff]
        %v542 = vld [vmem:[%s194 + $0x3e8] sm:$0xff]
        %v543 = vld [vmem:[%s194 + $0x3f0] sm:$0xff]
        %v544 = vld [vmem:[%s194 + $0x3f8] sm:$0xff]
        %v545 = vld [vmem:[%s194 + $0x400] sm:$0xff]
        %v546 = vld [vmem:[%s194 + $0x408] sm:$0xff]
        %v547 = vld [vmem:[%s194 + $0x410] sm:$0xff]
        %v548 = vld [vmem:[%s194 + $0x418] sm:$0xff]
        %v549 = vld [vmem:[%s194 + $0x420] sm:$0xff]
        %v550 = vld [vmem:[%s194 + $0x428] sm:$0xff]
        %v551 = vld [vmem:[%s194 + $0x430] sm:$0xff]
        %v552 = vld [vmem:[%s194 + $0x438] sm:$0xff]
        %v553 = vld [vmem:[%s194 + $0x440] sm:$0xff]
        %v554 = vld [vmem:[%s194 + $0x448] sm:$0xff]
        %v555 = vld [vmem:[%s194 + $0x450] sm:$0xff]
        %v556 = vld [vmem:[%s194 + $0x458] sm:$0xff]
        %v557 = vld [vmem:[%s194 + $0x460] sm:$0xff]
        %v558 = vld [vmem:[%s194 + $0x468] sm:$0xff]
        %v559 = vld [vmem:[%s194 + $0x470] sm:$0xff]
        %v560 = vld [vmem:[%s194 + $0x478] sm:$0xff]
        %561 = vmatpush.msra.mxu0 %v462
        %562 = vmatpush.msra.mxu0 %v459
        %563 = vmatpush.msra.mxu0 %v456
        %564 = vmatpush.msra.mxu0 %v453
        %565 = vmatpush.msra.mxu0 %v450
        %566 = vmatpush.msra.mxu0 %v447
        %567 = vmatpush.msra.mxu0 %v444
        %568 = vmatpush.msra.mxu0 %v441
        %569 = vmatpush.msra.mxu0 %v438
        %570 = vmatpush.msra.mxu0 %v435
        %571 = vmatpush.msra.mxu0 %v432
        %572 = vmatpush.msra.mxu0 %v429
        %573 = vmatpush.msra.mxu0 %v426
        %574 = vmatpush.msra.mxu0 %v423
        %575 = vmatpush.msra.mxu0 %v420
        %576 = vmatpush.msra.mxu0 %v417
        %577 = vmatmul.f32.gmra.mxu0 %v225
        %v578 = vpop.f32.mrf.mxu0
        %v579 = vadd.f32 0.0, %v578
        %580 = vmatmul.f32.gmra.mxu0 %v228
        %v581 = vpop.f32.mrf.mxu0
        %v582 = vadd.f32 0.0, %v581
        %583 = vmatmul.f32.gmra.mxu0 %v231
        %v584 = vpop.f32.mrf.mxu0
        %v585 = vadd.f32 0.0, %v584
        %586 = vmatmul.f32.gmra.mxu0 %v234
        %v587 = vpop.f32.mrf.mxu0
        %v588 = vadd.f32 0.0, %v587
        %589 = vmatmul.f32.gmra.mxu0 %v237
        %v590 = vpop.f32.mrf.mxu0
        %v591 = vadd.f32 0.0, %v590
        %592 = vmatmul.f32.gmra.mxu0 %v240
        %v593 = vpop.f32.mrf.mxu0
        %v594 = vadd.f32 0.0, %v593
        %595 = vmatmul.f32.gmra.mxu0 %v243
        %v596 = vpop.f32.mrf.mxu0
        %v597 = vadd.f32 0.0, %v596
        %598 = vmatmul.f32.gmra.mxu0 %v246
        %v599 = vpop.f32.mrf.mxu0
        %v600 = vadd.f32 0.0, %v599
        %601 = vmatmul.f32.gmra.mxu0 %v249
        %v602 = vpop.f32.mrf.mxu0
        %v603 = vadd.f32 0.0, %v602
        %604 = vmatmul.f32.gmra.mxu0 %v252
        %v605 = vpop.f32.mrf.mxu0
        %v606 = vadd.f32 0.0, %v605
        %607 = vmatmul.f32.gmra.mxu0 %v255
        %v608 = vpop.f32.mrf.mxu0
        %v609 = vadd.f32 0.0, %v608
        %610 = vmatmul.f32.gmra.mxu0 %v258
        %v611 = vpop.f32.mrf.mxu0
        %v612 = vadd.f32 0.0, %v611
        %613 = vmatmul.f32.gmra.mxu0 %v261
        %v614 = vpop.f32.mrf.mxu0
        %v615 = vadd.f32 0.0, %v614
        %616 = vmatmul.f32.gmra.mxu0 %v264
        %v617 = vpop.f32.mrf.mxu0
        %v618 = vadd.f32 0.0, %v617
        %619 = vmatmul.f32.gmra.mxu0 %v267
        %v620 = vpop.f32.mrf.mxu0
        %v621 = vadd.f32 0.0, %v620
        %622 = vmatmul.f32.gmra.mxu0 %v270
        %v623 = vpop.f32.mrf.mxu0
        %v624 = vadd.f32 0.0, %v623
        %625 = vmatmul.f32.gmra.mxu0 %v273
        %v626 = vpop.f32.mrf.mxu0
        %v627 = vadd.f32 0.0, %v626
        %628 = vmatmul.f32.gmra.mxu0 %v276
        %v629 = vpop.f32.mrf.mxu0
        %v630 = vadd.f32 0.0, %v629
        %631 = vmatmul.f32.gmra.mxu0 %v279
        %v632 = vpop.f32.mrf.mxu0
        %v633 = vadd.f32 0.0, %v632
        %634 = vmatmul.f32.gmra.mxu0 %v282
        %v635 = vpop.f32.mrf.mxu0
        %v636 = vadd.f32 0.0, %v635
        %637 = vmatmul.f32.gmra.mxu0 %v285
        %v638 = vpop.f32.mrf.mxu0
        %v639 = vadd.f32 0.0, %v638
        %640 = vmatmul.f32.gmra.mxu0 %v288
        %v641 = vpop.f32.mrf.mxu0
        %v642 = vadd.f32 0.0, %v641
        %643 = vmatmul.f32.gmra.mxu0 %v291
        %v644 = vpop.f32.mrf.mxu0
        %v645 = vadd.f32 0.0, %v644
        %646 = vmatmul.f32.gmra.mxu0 %v294
        %v647 = vpop.f32.mrf.mxu0
        %v648 = vadd.f32 0.0, %v647
        %649 = vmatmul.f32.gmra.mxu0 %v297
        %v650 = vpop.f32.mrf.mxu0
        %v651 = vadd.f32 0.0, %v650
        %652 = vmatmul.f32.gmra.mxu0 %v300
        %v653 = vpop.f32.mrf.mxu0
        %v654 = vadd.f32 0.0, %v653
        %655 = vmatmul.f32.gmra.mxu0 %v303
        %v656 = vpop.f32.mrf.mxu0
        %v657 = vadd.f32 0.0, %v656
        %658 = vmatmul.f32.gmra.mxu0 %v306
        %v659 = vpop.f32.mrf.mxu0
        %v660 = vadd.f32 0.0, %v659
        %661 = vmatmul.f32.gmra.mxu0 %v309
        %v662 = vpop.f32.mrf.mxu0
        %v663 = vadd.f32 0.0, %v662
        %664 = vmatmul.f32.gmra.mxu0 %v312
        %v665 = vpop.f32.mrf.mxu0
        %v666 = vadd.f32 0.0, %v665
        %667 = vmatmul.f32.gmra.mxu0 %v315
        %v668 = vpop.f32.mrf.mxu0
        %v669 = vadd.f32 0.0, %v668
        %670 = vmatmul.f32.gmra.mxu0 %v318
        %v671 = vpop.f32.mrf.mxu0
        %v672 = vadd.f32 0.0, %v671
        %673 = vmatmul.f32.gmra.mxu0 %v321
        %v674 = vpop.f32.mrf.mxu0
        %v675 = vadd.f32 0.0, %v674
        %676 = vmatmul.f32.gmra.mxu0 %v324
        %v677 = vpop.f32.mrf.mxu0
        %v678 = vadd.f32 0.0, %v677
        %679 = vmatmul.f32.gmra.mxu0 %v327
        %v680 = vpop.f32.mrf.mxu0
        %v681 = vadd.f32 0.0, %v680
        %682 = vmatmul.f32.gmra.mxu0 %v330
        %v683 = vpop.f32.mrf.mxu0
        %v684 = vadd.f32 0.0, %v683
        %685 = vmatmul.f32.gmra.mxu0 %v333
        %v686 = vpop.f32.mrf.mxu0
        %v687 = vadd.f32 0.0, %v686
        %688 = vmatmul.f32.gmra.mxu0 %v336
        %v689 = vpop.f32.mrf.mxu0
        %v690 = vadd.f32 0.0, %v689
        %691 = vmatmul.f32.gmra.mxu0 %v339
        %v692 = vpop.f32.mrf.mxu0
        %v693 = vadd.f32 0.0, %v692
        %694 = vmatmul.f32.gmra.mxu0 %v342
        %v695 = vpop.f32.mrf.mxu0
        %v696 = vadd.f32 0.0, %v695
        %697 = vmatmul.f32.gmra.mxu0 %v345
        %v698 = vpop.f32.mrf.mxu0
        %v699 = vadd.f32 0.0, %v698
        %700 = vmatmul.f32.gmra.mxu0 %v348
        %v701 = vpop.f32.mrf.mxu0
        %v702 = vadd.f32 0.0, %v701
        %703 = vmatmul.f32.gmra.mxu0 %v351
        %v704 = vpop.f32.mrf.mxu0
        %v705 = vadd.f32 0.0, %v704
        %706 = vmatmul.f32.gmra.mxu0 %v354
        %v707 = vpop.f32.mrf.mxu0
        %v708 = vadd.f32 0.0, %v707
        %709 = vmatmul.f32.gmra.mxu0 %v357
        %v710 = vpop.f32.mrf.mxu0
        %v711 = vadd.f32 0.0, %v710
        %712 = vmatmul.f32.gmra.mxu0 %v360
        %v713 = vpop.f32.mrf.mxu0
        %v714 = vadd.f32 0.0, %v713
        %715 = vmatmul.f32.gmra.mxu0 %v363
        %v716 = vpop.f32.mrf.mxu0
        %v717 = vadd.f32 0.0, %v716
        %718 = vmatmul.f32.gmra.mxu0 %v366
        %v719 = vpop.f32.mrf.mxu0
        %v720 = vadd.f32 0.0, %v719
        %721 = vmatmul.f32.gmra.mxu0 %v369
        %v722 = vpop.f32.mrf.mxu0
        %v723 = vadd.f32 0.0, %v722
        %724 = vmatmul.f32.gmra.mxu0 %v372
        %v725 = vpop.f32.mrf.mxu0
        %v726 = vadd.f32 0.0, %v725
        %727 = vmatmul.f32.gmra.mxu0 %v375
        %v728 = vpop.f32.mrf.mxu0
        %v729 = vadd.f32 0.0, %v728
        %730 = vmatmul.f32.gmra.mxu0 %v378
        %v731 = vpop.f32.mrf.mxu0
        %v732 = vadd.f32 0.0, %v731
        %733 = vmatmul.f32.gmra.mxu0 %v381
        %v734 = vpop.f32.mrf.mxu0
        %v735 = vadd.f32 0.0, %v734
        %736 = vmatmul.f32.gmra.mxu0 %v384
        %v737 = vpop.f32.mrf.mxu0
        %v738 = vadd.f32 0.0, %v737
        %739 = vmatmul.f32.gmra.mxu0 %v387
        %v740 = vpop.f32.mrf.mxu0
        %v741 = vadd.f32 0.0, %v740
        %742 = vmatmul.f32.gmra.mxu0 %v390
        %v743 = vpop.f32.mrf.mxu0
        %v744 = vadd.f32 0.0, %v743
        %745 = vmatmul.f32.gmra.mxu0 %v393
        %v746 = vpop.f32.mrf.mxu0
        %v747 = vadd.f32 0.0, %v746
        %748 = vmatmul.f32.gmra.mxu0 %v396
        %v749 = vpop.f32.mrf.mxu0
        %v750 = vadd.f32 0.0, %v749
        %751 = vmatmul.f32.gmra.mxu0 %v399
        %v752 = vpop.f32.mrf.mxu0
        %v753 = vadd.f32 0.0, %v752
        %754 = vmatmul.f32.gmra.mxu0 %v402
        %v755 = vpop.f32.mrf.mxu0
        %v756 = vadd.f32 0.0, %v755
        %757 = vmatmul.f32.gmra.mxu0 %v405
        %v758 = vpop.f32.mrf.mxu0
        %v759 = vadd.f32 0.0, %v758
        %760 = vmatmul.f32.gmra.mxu0 %v408
        %v761 = vpop.f32.mrf.mxu0
        %v762 = vadd.f32 0.0, %v761
        %763 = vmatmul.f32.gmra.mxu0 %v411
        %v764 = vpop.f32.mrf.mxu0
        %v765 = vadd.f32 0.0, %v764
        %766 = vmatmul.f32.gmra.mxu0 %v414
        %v767 = vpop.f32.mrf.mxu0
        %v768 = vadd.f32 0.0, %v767
        %769 = vdwg.mxu0
        %770 = vmatpush.msra.mxu0 %v510
        %771 = vmatpush.msra.mxu0 %v507
        %772 = vmatpush.msra.mxu0 %v504
        %773 = vmatpush.msra.mxu0 %v501
        %774 = vmatpush.msra.mxu0 %v498
        %775 = vmatpush.msra.mxu0 %v495
        %776 = vmatpush.msra.mxu0 %v492
        %777 = vmatpush.msra.mxu0 %v489
        %778 = vmatpush.msra.mxu0 %v486
        %779 = vmatpush.msra.mxu0 %v483
        %780 = vmatpush.msra.mxu0 %v480
        %781 = vmatpush.msra.mxu0 %v477
        %782 = vmatpush.msra.mxu0 %v474
        %783 = vmatpush.msra.mxu0 %v471
        %784 = vmatpush.msra.mxu0 %v468
        %785 = vmatpush.msra.mxu0 %v465
        %786 = vmatmul.f32.gmra.mxu0 %v226
        %v787 = vpop.f32.mrf.mxu0
        %v788 = vadd.f32 %v579, %v787
        %789 = vmatmul.f32.gmra.mxu0 %v229
        %v790 = vpop.f32.mrf.mxu0
        %v791 = vadd.f32 %v582, %v790
        %792 = vmatmul.f32.gmra.mxu0 %v232
        %v793 = vpop.f32.mrf.mxu0
        %v794 = vadd.f32 %v585, %v793
        %795 = vmatmul.f32.gmra.mxu0 %v235
        %v796 = vpop.f32.mrf.mxu0
        %v797 = vadd.f32 %v588, %v796
        %798 = vmatmul.f32.gmra.mxu0 %v238
        %v799 = vpop.f32.mrf.mxu0
        %v800 = vadd.f32 %v591, %v799
        %801 = vmatmul.f32.gmra.mxu0 %v241
        %v802 = vpop.f32.mrf.mxu0
        %v803 = vadd.f32 %v594, %v802
        %804 = vmatmul.f32.gmra.mxu0 %v244
        %v805 = vpop.f32.mrf.mxu0
        %v806 = vadd.f32 %v597, %v805
        %807 = vmatmul.f32.gmra.mxu0 %v247
        %v808 = vpop.f32.mrf.mxu0
        %v809 = vadd.f32 %v600, %v808
        %810 = vmatmul.f32.gmra.mxu0 %v250
        %v811 = vpop.f32.mrf.mxu0
        %v812 = vadd.f32 %v603, %v811
        %813 = vmatmul.f32.gmra.mxu0 %v253
        %v814 = vpop.f32.mrf.mxu0
        %v815 = vadd.f32 %v606, %v814
        %816 = vmatmul.f32.gmra.mxu0 %v256
        %v817 = vpop.f32.mrf.mxu0
        %v818 = vadd.f32 %v609, %v817
        %819 = vmatmul.f32.gmra.mxu0 %v259
        %v820 = vpop.f32.mrf.mxu0
        %v821 = vadd.f32 %v612, %v820
        %822 = vmatmul.f32.gmra.mxu0 %v262
        %v823 = vpop.f32.mrf.mxu0
        %v824 = vadd.f32 %v615, %v823
        %825 = vmatmul.f32.gmra.mxu0 %v265
        %v826 = vpop.f32.mrf.mxu0
        %v827 = vadd.f32 %v618, %v826
        %828 = vmatmul.f32.gmra.mxu0 %v268
        %v829 = vpop.f32.mrf.mxu0
        %v830 = vadd.f32 %v621, %v829
        %831 = vmatmul.f32.gmra.mxu0 %v271
        %v832 = vpop.f32.mrf.mxu0
        %v833 = vadd.f32 %v624, %v832
        %834 = vmatmul.f32.gmra.mxu0 %v274
        %v835 = vpop.f32.mrf.mxu0
        %v836 = vadd.f32 %v627, %v835
        %837 = vmatmul.f32.gmra.mxu0 %v277
        %v838 = vpop.f32.mrf.mxu0
        %v839 = vadd.f32 %v630, %v838
        %840 = vmatmul.f32.gmra.mxu0 %v280
        %v841 = vpop.f32.mrf.mxu0
        %v842 = vadd.f32 %v633, %v841
        %843 = vmatmul.f32.gmra.mxu0 %v283
        %v844 = vpop.f32.mrf.mxu0
        %v845 = vadd.f32 %v636, %v844
        %846 = vmatmul.f32.gmra.mxu0 %v286
        %v847 = vpop.f32.mrf.mxu0
        %v848 = vadd.f32 %v639, %v847
        %849 = vmatmul.f32.gmra.mxu0 %v289
        %v850 = vpop.f32.mrf.mxu0
        %v851 = vadd.f32 %v642, %v850
        %852 = vmatmul.f32.gmra.mxu0 %v292
        %v853 = vpop.f32.mrf.mxu0
        %v854 = vadd.f32 %v645, %v853
        %855 = vmatmul.f32.gmra.mxu0 %v295
        %v856 = vpop.f32.mrf.mxu0
        %v857 = vadd.f32 %v648, %v856
        %858 = vmatmul.f32.gmra.mxu0 %v298
        %v859 = vpop.f32.mrf.mxu0
        %v860 = vadd.f32 %v651, %v859
        %861 = vmatmul.f32.gmra.mxu0 %v301
        %v862 = vpop.f32.mrf.mxu0
        %v863 = vadd.f32 %v654, %v862
        %864 = vmatmul.f32.gmra.mxu0 %v304
        %v865 = vpop.f32.mrf.mxu0
        %v866 = vadd.f32 %v657, %v865
        %867 = vmatmul.f32.gmra.mxu0 %v307
        %v868 = vpop.f32.mrf.mxu0
        %v869 = vadd.f32 %v660, %v868
        %870 = vmatmul.f32.gmra.mxu0 %v310
        %v871 = vpop.f32.mrf.mxu0
        %v872 = vadd.f32 %v663, %v871
        %873 = vmatmul.f32.gmra.mxu0 %v313
        %v874 = vpop.f32.mrf.mxu0
        %v875 = vadd.f32 %v666, %v874
        %876 = vmatmul.f32.gmra.mxu0 %v316
        %v877 = vpop.f32.mrf.mxu0
        %v878 = vadd.f32 %v669, %v877
        %879 = vmatmul.f32.gmra.mxu0 %v319
        %v880 = vpop.f32.mrf.mxu0
        %v881 = vadd.f32 %v672, %v880
        %882 = vmatmul.f32.gmra.mxu0 %v322
        %v883 = vpop.f32.mrf.mxu0
        %v884 = vadd.f32 %v675, %v883
        %885 = vmatmul.f32.gmra.mxu0 %v325
        %v886 = vpop.f32.mrf.mxu0
        %v887 = vadd.f32 %v678, %v886
        %888 = vmatmul.f32.gmra.mxu0 %v328
        %v889 = vpop.f32.mrf.mxu0
        %v890 = vadd.f32 %v681, %v889
        %891 = vmatmul.f32.gmra.mxu0 %v331
        %v892 = vpop.f32.mrf.mxu0
        %v893 = vadd.f32 %v684, %v892
        %894 = vmatmul.f32.gmra.mxu0 %v334
        %v895 = vpop.f32.mrf.mxu0
        %v896 = vadd.f32 %v687, %v895
        %897 = vmatmul.f32.gmra.mxu0 %v337
        %v898 = vpop.f32.mrf.mxu0
        %v899 = vadd.f32 %v690, %v898
        %900 = vmatmul.f32.gmra.mxu0 %v340
        %v901 = vpop.f32.mrf.mxu0
        %v902 = vadd.f32 %v693, %v901
        %903 = vmatmul.f32.gmra.mxu0 %v343
        %v904 = vpop.f32.mrf.mxu0
        %v905 = vadd.f32 %v696, %v904
        %906 = vmatmul.f32.gmra.mxu0 %v346
        %v907 = vpop.f32.mrf.mxu0
        %v908 = vadd.f32 %v699, %v907
        %909 = vmatmul.f32.gmra.mxu0 %v349
        %v910 = vpop.f32.mrf.mxu0
        %v911 = vadd.f32 %v702, %v910
        %912 = vmatmul.f32.gmra.mxu0 %v352
        %v913 = vpop.f32.mrf.mxu0
        %v914 = vadd.f32 %v705, %v913
        %915 = vmatmul.f32.gmra.mxu0 %v355
        %v916 = vpop.f32.mrf.mxu0
        %v917 = vadd.f32 %v708, %v916
        %918 = vmatmul.f32.gmra.mxu0 %v358
        %v919 = vpop.f32.mrf.mxu0
        %v920 = vadd.f32 %v711, %v919
        %921 = vmatmul.f32.gmra.mxu0 %v361
        %v922 = vpop.f32.mrf.mxu0
        %v923 = vadd.f32 %v714, %v922
        %924 = vmatmul.f32.gmra.mxu0 %v364
        %v925 = vpop.f32.mrf.mxu0
        %v926 = vadd.f32 %v717, %v925
        %927 = vmatmul.f32.gmra.mxu0 %v367
        %v928 = vpop.f32.mrf.mxu0
        %v929 = vadd.f32 %v720, %v928
        %930 = vmatmul.f32.gmra.mxu0 %v370
        %v931 = vpop.f32.mrf.mxu0
        %v932 = vadd.f32 %v723, %v931
        %933 = vmatmul.f32.gmra.mxu0 %v373
        %v934 = vpop.f32.mrf.mxu0
        %v935 = vadd.f32 %v726, %v934
        %936 = vmatmul.f32.gmra.mxu0 %v376
        %v937 = vpop.f32.mrf.mxu0
        %v938 = vadd.f32 %v729, %v937
        %939 = vmatmul.f32.gmra.mxu0 %v379
        %v940 = vpop.f32.mrf.mxu0
        %v941 = vadd.f32 %v732, %v940
        %942 = vmatmul.f32.gmra.mxu0 %v382
        %v943 = vpop.f32.mrf.mxu0
        %v944 = vadd.f32 %v735, %v943
        %945 = vmatmul.f32.gmra.mxu0 %v385
        %v946 = vpop.f32.mrf.mxu0
        %v947 = vadd.f32 %v738, %v946
        %948 = vmatmul.f32.gmra.mxu0 %v388
        %v949 = vpop.f32.mrf.mxu0
        %v950 = vadd.f32 %v741, %v949
        %951 = vmatmul.f32.gmra.mxu0 %v391
        %v952 = vpop.f32.mrf.mxu0
        %v953 = vadd.f32 %v744, %v952
        %954 = vmatmul.f32.gmra.mxu0 %v394
        %v955 = vpop.f32.mrf.mxu0
        %v956 = vadd.f32 %v747, %v955
        %957 = vmatmul.f32.gmra.mxu0 %v397
        %v958 = vpop.f32.mrf.mxu0
        %v959 = vadd.f32 %v750, %v958
        %960 = vmatmul.f32.gmra.mxu0 %v400
        %v961 = vpop.f32.mrf.mxu0
        %v962 = vadd.f32 %v753, %v961
        %963 = vmatmul.f32.gmra.mxu0 %v403
        %v964 = vpop.f32.mrf.mxu0
        %v965 = vadd.f32 %v756, %v964
        %966 = vmatmul.f32.gmra.mxu0 %v406
        %v967 = vpop.f32.mrf.mxu0
        %v968 = vadd.f32 %v759, %v967
        %969 = vmatmul.f32.gmra.mxu0 %v409
        %v970 = vpop.f32.mrf.mxu0
        %v971 = vadd.f32 %v762, %v970
        %972 = vmatmul.f32.gmra.mxu0 %v412
        %v973 = vpop.f32.mrf.mxu0
        %v974 = vadd.f32 %v765, %v973
        %975 = vmatmul.f32.gmra.mxu0 %v415
        %v976 = vpop.f32.mrf.mxu0
        %v977 = vadd.f32 %v768, %v976
        %978 = vdwg.mxu0
        %979 = vmatpush.msra.mxu0 %v558
        %980 = vmatpush.msra.mxu0 %v555
        %981 = vmatpush.msra.mxu0 %v552
        %982 = vmatpush.msra.mxu0 %v549
        %983 = vmatpush.msra.mxu0 %v546
        %984 = vmatpush.msra.mxu0 %v543
        %985 = vmatpush.msra.mxu0 %v540
        %986 = vmatpush.msra.mxu0 %v537
        %987 = vmatpush.msra.mxu0 %v534
        %988 = vmatpush.msra.mxu0 %v531
        %989 = vmatpush.msra.mxu0 %v528
        %990 = vmatpush.msra.mxu0 %v525
        %991 = vmatpush.msra.mxu0 %v522
        %992 = vmatpush.msra.mxu0 %v519
        %993 = vmatpush.msra.mxu0 %v516
        %994 = vmatpush.msra.mxu0 %v513
        %995 = vmatmul.f32.gmra.mxu0 %v227
        %v996 = vpop.f32.mrf.mxu0
        %v997 = vadd.f32 %v788, %v996
        %998 = vmatmul.f32.gmra.mxu0 %v230
        %v999 = vpop.f32.mrf.mxu0
        %v1000 = vadd.f32 %v791, %v999
        %1001 = vmatmul.f32.gmra.mxu0 %v233
        %v1002 = vpop.f32.mrf.mxu0
        %v1003 = vadd.f32 %v794, %v1002
        %1004 = vmatmul.f32.gmra.mxu0 %v236
        %v1005 = vpop.f32.mrf.mxu0
        %v1006 = vadd.f32 %v797, %v1005
        %1007 = vmatmul.f32.gmra.mxu0 %v239
        %v1008 = vpop.f32.mrf.mxu0
        %v1009 = vadd.f32 %v800, %v1008
        %1010 = vmatmul.f32.gmra.mxu0 %v242
        %v1011 = vpop.f32.mrf.mxu0
        %v1012 = vadd.f32 %v803, %v1011
        %1013 = vmatmul.f32.gmra.mxu0 %v245
        %v1014 = vpop.f32.mrf.mxu0
        %v1015 = vadd.f32 %v806, %v1014
        %1016 = vmatmul.f32.gmra.mxu0 %v248
        %v1017 = vpop.f32.mrf.mxu0
        %v1018 = vadd.f32 %v809, %v1017
        %1019 = vmatmul.f32.gmra.mxu0 %v251
        %v1020 = vpop.f32.mrf.mxu0
        %v1021 = vadd.f32 %v812, %v1020
        %1022 = vmatmul.f32.gmra.mxu0 %v254
        %v1023 = vpop.f32.mrf.mxu0
        %v1024 = vadd.f32 %v815, %v1023
        %1025 = vmatmul.f32.gmra.mxu0 %v257
        %v1026 = vpop.f32.mrf.mxu0
        %v1027 = vadd.f32 %v818, %v1026
        %1028 = vmatmul.f32.gmra.mxu0 %v260
        %v1029 = vpop.f32.mrf.mxu0
        %v1030 = vadd.f32 %v821, %v1029
        %1031 = vmatmul.f32.gmra.mxu0 %v263
        %v1032 = vpop.f32.mrf.mxu0
        %v1033 = vadd.f32 %v824, %v1032
        %1034 = vmatmul.f32.gmra.mxu0 %v266
        %v1035 = vpop.f32.mrf.mxu0
        %v1036 = vadd.f32 %v827, %v1035
        %1037 = vmatmul.f32.gmra.mxu0 %v269
        %v1038 = vpop.f32.mrf.mxu0
        %v1039 = vadd.f32 %v830, %v1038
        %1040 = vmatmul.f32.gmra.mxu0 %v272
        %v1041 = vpop.f32.mrf.mxu0
        %v1042 = vadd.f32 %v833, %v1041
        %1043 = vmatmul.f32.gmra.mxu0 %v275
        %v1044 = vpop.f32.mrf.mxu0
        %v1045 = vadd.f32 %v836, %v1044
        %1046 = vmatmul.f32.gmra.mxu0 %v278
        %v1047 = vpop.f32.mrf.mxu0
        %v1048 = vadd.f32 %v839, %v1047
        %1049 = vmatmul.f32.gmra.mxu0 %v281
        %v1050 = vpop.f32.mrf.mxu0
        %v1051 = vadd.f32 %v842, %v1050
        %1052 = vmatmul.f32.gmra.mxu0 %v284
        %v1053 = vpop.f32.mrf.mxu0
        %v1054 = vadd.f32 %v845, %v1053
        %1055 = vmatmul.f32.gmra.mxu0 %v287
        %v1056 = vpop.f32.mrf.mxu0
        %v1057 = vadd.f32 %v848, %v1056
        %1058 = vmatmul.f32.gmra.mxu0 %v290
        %v1059 = vpop.f32.mrf.mxu0
        %v1060 = vadd.f32 %v851, %v1059
        %1061 = vmatmul.f32.gmra.mxu0 %v293
        %v1062 = vpop.f32.mrf.mxu0
        %v1063 = vadd.f32 %v854, %v1062
        %1064 = vmatmul.f32.gmra.mxu0 %v296
        %v1065 = vpop.f32.mrf.mxu0
        %v1066 = vadd.f32 %v857, %v1065
        %1067 = vmatmul.f32.gmra.mxu0 %v299
        %v1068 = vpop.f32.mrf.mxu0
        %v1069 = vadd.f32 %v860, %v1068
        %1070 = vmatmul.f32.gmra.mxu0 %v302
        %v1071 = vpop.f32.mrf.mxu0
        %v1072 = vadd.f32 %v863, %v1071
        %1073 = vmatmul.f32.gmra.mxu0 %v305
        %v1074 = vpop.f32.mrf.mxu0
        %v1075 = vadd.f32 %v866, %v1074
        %1076 = vmatmul.f32.gmra.mxu0 %v308
        %v1077 = vpop.f32.mrf.mxu0
        %v1078 = vadd.f32 %v869, %v1077
        %1079 = vmatmul.f32.gmra.mxu0 %v311
        %v1080 = vpop.f32.mrf.mxu0
        %v1081 = vadd.f32 %v872, %v1080
        %1082 = vmatmul.f32.gmra.mxu0 %v314
        %v1083 = vpop.f32.mrf.mxu0
        %v1084 = vadd.f32 %v875, %v1083
        %1085 = vmatmul.f32.gmra.mxu0 %v317
        %v1086 = vpop.f32.mrf.mxu0
        %v1087 = vadd.f32 %v878, %v1086
        %1088 = vmatmul.f32.gmra.mxu0 %v320
        %v1089 = vpop.f32.mrf.mxu0
        %v1090 = vadd.f32 %v881, %v1089
        %1091 = vmatmul.f32.gmra.mxu0 %v323
        %v1092 = vpop.f32.mrf.mxu0
        %v1093 = vadd.f32 %v884, %v1092
        %1094 = vmatmul.f32.gmra.mxu0 %v326
        %v1095 = vpop.f32.mrf.mxu0
        %v1096 = vadd.f32 %v887, %v1095
        %1097 = vmatmul.f32.gmra.mxu0 %v329
        %v1098 = vpop.f32.mrf.mxu0
        %v1099 = vadd.f32 %v890, %v1098
        %1100 = vmatmul.f32.gmra.mxu0 %v332
        %v1101 = vpop.f32.mrf.mxu0
        %v1102 = vadd.f32 %v893, %v1101
        %1103 = vmatmul.f32.gmra.mxu0 %v335
        %v1104 = vpop.f32.mrf.mxu0
        %v1105 = vadd.f32 %v896, %v1104
        %1106 = vmatmul.f32.gmra.mxu0 %v338
        %v1107 = vpop.f32.mrf.mxu0
        %v1108 = vadd.f32 %v899, %v1107
        %1109 = vmatmul.f32.gmra.mxu0 %v341
        %v1110 = vpop.f32.mrf.mxu0
        %v1111 = vadd.f32 %v902, %v1110
        %1112 = vmatmul.f32.gmra.mxu0 %v344
        %v1113 = vpop.f32.mrf.mxu0
        %v1114 = vadd.f32 %v905, %v1113
        %1115 = vmatmul.f32.gmra.mxu0 %v347
        %v1116 = vpop.f32.mrf.mxu0
        %v1117 = vadd.f32 %v908, %v1116
        %1118 = vmatmul.f32.gmra.mxu0 %v350
        %v1119 = vpop.f32.mrf.mxu0
        %v1120 = vadd.f32 %v911, %v1119
        %1121 = vmatmul.f32.gmra.mxu0 %v353
        %v1122 = vpop.f32.mrf.mxu0
        %v1123 = vadd.f32 %v914, %v1122
        %1124 = vmatmul.f32.gmra.mxu0 %v356
        %v1125 = vpop.f32.mrf.mxu0
        %v1126 = vadd.f32 %v917, %v1125
        %1127 = vmatmul.f32.gmra.mxu0 %v359
        %v1128 = vpop.f32.mrf.mxu0
        %v1129 = vadd.f32 %v920, %v1128
        %1130 = vmatmul.f32.gmra.mxu0 %v362
        %v1131 = vpop.f32.mrf.mxu0
        %v1132 = vadd.f32 %v923, %v1131
        %1133 = vmatmul.f32.gmra.mxu0 %v365
        %v1134 = vpop.f32.mrf.mxu0
        %v1135 = vadd.f32 %v926, %v1134
        %1136 = vmatmul.f32.gmra.mxu0 %v368
        %v1137 = vpop.f32.mrf.mxu0
        %v1138 = vadd.f32 %v929, %v1137
        %1139 = vmatmul.f32.gmra.mxu0 %v371
        %v1140 = vpop.f32.mrf.mxu0
        %v1141 = vadd.f32 %v932, %v1140
        %1142 = vmatmul.f32.gmra.mxu0 %v374
        %v1143 = vpop.f32.mrf.mxu0
        %v1144 = vadd.f32 %v935, %v1143
        %1145 = vmatmul.f32.gmra.mxu0 %v377
        %v1146 = vpop.f32.mrf.mxu0
        %v1147 = vadd.f32 %v938, %v1146
        %1148 = vmatmul.f32.gmra.mxu0 %v380
        %v1149 = vpop.f32.mrf.mxu0
        %v1150 = vadd.f32 %v941, %v1149
        %1151 = vmatmul.f32.gmra.mxu0 %v383
        %v1152 = vpop.f32.mrf.mxu0
        %v1153 = vadd.f32 %v944, %v1152
        %1154 = vmatmul.f32.gmra.mxu0 %v386
        %v1155 = vpop.f32.mrf.mxu0
        %v1156 = vadd.f32 %v947, %v1155
        %1157 = vmatmul.f32.gmra.mxu0 %v389
        %v1158 = vpop.f32.mrf.mxu0
        %v1159 = vadd.f32 %v950, %v1158
        %1160 = vmatmul.f32.gmra.mxu0 %v392
        %v1161 = vpop.f32.mrf.mxu0
        %v1162 = vadd.f32 %v953, %v1161
        %1163 = vmatmul.f32.gmra.mxu0 %v395
        %v1164 = vpop.f32.mrf.mxu0
        %v1165 = vadd.f32 %v956, %v1164
        %1166 = vmatmul.f32.gmra.mxu0 %v398
        %v1167 = vpop.f32.mrf.mxu0
        %v1168 = vadd.f32 %v959, %v1167
        %1169 = vmatmul.f32.gmra.mxu0 %v401
        %v1170 = vpop.f32.mrf.mxu0
        %v1171 = vadd.f32 %v962, %v1170
        %1172 = vmatmul.f32.gmra.mxu0 %v404
        %v1173 = vpop.f32.mrf.mxu0
        %v1174 = vadd.f32 %v965, %v1173
        %1175 = vmatmul.f32.gmra.mxu0 %v407
        %v1176 = vpop.f32.mrf.mxu0
        %v1177 = vadd.f32 %v968, %v1176
        %1178 = vmatmul.f32.gmra.mxu0 %v410
        %v1179 = vpop.f32.mrf.mxu0
        %v1180 = vadd.f32 %v971, %v1179
        %1181 = vmatmul.f32.gmra.mxu0 %v413
        %v1182 = vpop.f32.mrf.mxu0
        %v1183 = vadd.f32 %v974, %v1182
        %1184 = vmatmul.f32.gmra.mxu0 %v416
        %v1185 = vpop.f32.mrf.mxu0
        %v1186 = vadd.f32 %v977, %v1185
        %1187 = vdwg.mxu0
        %1188 = vmatpush.msra.mxu0 %v463
        %1189 = vmatpush.msra.mxu0 %v460
        %1190 = vmatpush.msra.mxu0 %v457
        %1191 = vmatpush.msra.mxu0 %v454
        %1192 = vmatpush.msra.mxu0 %v451
        %1193 = vmatpush.msra.mxu0 %v448
        %1194 = vmatpush.msra.mxu0 %v445
        %1195 = vmatpush.msra.mxu0 %v442
        %1196 = vmatpush.msra.mxu0 %v439
        %1197 = vmatpush.msra.mxu0 %v436
        %1198 = vmatpush.msra.mxu0 %v433
        %1199 = vmatpush.msra.mxu0 %v430
        %1200 = vmatpush.msra.mxu0 %v427
        %1201 = vmatpush.msra.mxu0 %v424
        %1202 = vmatpush.msra.mxu0 %v421
        %1203 = vmatpush.msra.mxu0 %v418
        %1204 = vmatmul.f32.gmra.mxu0 %v225
        %v1205 = vpop.f32.mrf.mxu0
        %v1206 = vadd.f32 0.0, %v1205
        %1207 = vmatmul.f32.gmra.mxu0 %v228
        %v1208 = vpop.f32.mrf.mxu0
        %v1209 = vadd.f32 0.0, %v1208
        %1210 = vmatmul.f32.gmra.mxu0 %v231
        %v1211 = vpop.f32.mrf.mxu0
        %v1212 = vadd.f32 0.0, %v1211
        %1213 = vmatmul.f32.gmra.mxu0 %v234
        %v1214 = vpop.f32.mrf.mxu0
        %v1215 = vadd.f32 0.0, %v1214
        %1216 = vmatmul.f32.gmra.mxu0 %v237
        %v1217 = vpop.f32.mrf.mxu0
        %v1218 = vadd.f32 0.0, %v1217
        %1219 = vmatmul.f32.gmra.mxu0 %v240
        %v1220 = vpop.f32.mrf.mxu0
        %v1221 = vadd.f32 0.0, %v1220
        %1222 = vmatmul.f32.gmra.mxu0 %v243
        %v1223 = vpop.f32.mrf.mxu0
        %v1224 = vadd.f32 0.0, %v1223
        %1225 = vmatmul.f32.gmra.mxu0 %v246
        %v1226 = vpop.f32.mrf.mxu0
        %v1227 = vadd.f32 0.0, %v1226
        %1228 = vmatmul.f32.gmra.mxu0 %v249
        %v1229 = vpop.f32.mrf.mxu0
        %v1230 = vadd.f32 0.0, %v1229
        %1231 = vmatmul.f32.gmra.mxu0 %v252
        %v1232 = vpop.f32.mrf.mxu0
        %v1233 = vadd.f32 0.0, %v1232
        %1234 = vmatmul.f32.gmra.mxu0 %v255
        %v1235 = vpop.f32.mrf.mxu0
        %v1236 = vadd.f32 0.0, %v1235
        %1237 = vmatmul.f32.gmra.mxu0 %v258
        %v1238 = vpop.f32.mrf.mxu0
        %v1239 = vadd.f32 0.0, %v1238
        %1240 = vmatmul.f32.gmra.mxu0 %v261
        %v1241 = vpop.f32.mrf.mxu0
        %v1242 = vadd.f32 0.0, %v1241
        %1243 = vmatmul.f32.gmra.mxu0 %v264
        %v1244 = vpop.f32.mrf.mxu0
        %v1245 = vadd.f32 0.0, %v1244
        %1246 = vmatmul.f32.gmra.mxu0 %v267
        %v1247 = vpop.f32.mrf.mxu0
        %v1248 = vadd.f32 0.0, %v1247
        %1249 = vmatmul.f32.gmra.mxu0 %v270
        %v1250 = vpop.f32.mrf.mxu0
        %v1251 = vadd.f32 0.0, %v1250
        %1252 = vmatmul.f32.gmra.mxu0 %v273
        %v1253 = vpop.f32.mrf.mxu0
        %v1254 = vadd.f32 0.0, %v1253
        %1255 = vmatmul.f32.gmra.mxu0 %v276
        %v1256 = vpop.f32.mrf.mxu0
        %v1257 = vadd.f32 0.0, %v1256
        %1258 = vmatmul.f32.gmra.mxu0 %v279
        %v1259 = vpop.f32.mrf.mxu0
        %v1260 = vadd.f32 0.0, %v1259
        %1261 = vmatmul.f32.gmra.mxu0 %v282
        %v1262 = vpop.f32.mrf.mxu0
        %v1263 = vadd.f32 0.0, %v1262
        %1264 = vmatmul.f32.gmra.mxu0 %v285
        %v1265 = vpop.f32.mrf.mxu0
        %v1266 = vadd.f32 0.0, %v1265
        %1267 = vmatmul.f32.gmra.mxu0 %v288
        %v1268 = vpop.f32.mrf.mxu0
        %v1269 = vadd.f32 0.0, %v1268
        %1270 = vmatmul.f32.gmra.mxu0 %v291
        %v1271 = vpop.f32.mrf.mxu0
        %v1272 = vadd.f32 0.0, %v1271
        %1273 = vmatmul.f32.gmra.mxu0 %v294
        %v1274 = vpop.f32.mrf.mxu0
        %v1275 = vadd.f32 0.0, %v1274
        %1276 = vmatmul.f32.gmra.mxu0 %v297
        %v1277 = vpop.f32.mrf.mxu0
        %v1278 = vadd.f32 0.0, %v1277
        %1279 = vmatmul.f32.gmra.mxu0 %v300
        %v1280 = vpop.f32.mrf.mxu0
        %v1281 = vadd.f32 0.0, %v1280
        %1282 = vmatmul.f32.gmra.mxu0 %v303
        %v1283 = vpop.f32.mrf.mxu0
        %v1284 = vadd.f32 0.0, %v1283
        %1285 = vmatmul.f32.gmra.mxu0 %v306
        %v1286 = vpop.f32.mrf.mxu0
        %v1287 = vadd.f32 0.0, %v1286
        %1288 = vmatmul.f32.gmra.mxu0 %v309
        %v1289 = vpop.f32.mrf.mxu0
        %v1290 = vadd.f32 0.0, %v1289
        %1291 = vmatmul.f32.gmra.mxu0 %v312
        %v1292 = vpop.f32.mrf.mxu0
        %v1293 = vadd.f32 0.0, %v1292
        %1294 = vmatmul.f32.gmra.mxu0 %v315
        %v1295 = vpop.f32.mrf.mxu0
        %v1296 = vadd.f32 0.0, %v1295
        %1297 = vmatmul.f32.gmra.mxu0 %v318
        %v1298 = vpop.f32.mrf.mxu0
        %v1299 = vadd.f32 0.0, %v1298
        %1300 = vmatmul.f32.gmra.mxu0 %v321
        %v1301 = vpop.f32.mrf.mxu0
        %v1302 = vadd.f32 0.0, %v1301
        %1303 = vmatmul.f32.gmra.mxu0 %v324
        %v1304 = vpop.f32.mrf.mxu0
        %v1305 = vadd.f32 0.0, %v1304
        %1306 = vmatmul.f32.gmra.mxu0 %v327
        %v1307 = vpop.f32.mrf.mxu0
        %v1308 = vadd.f32 0.0, %v1307
        %1309 = vmatmul.f32.gmra.mxu0 %v330
        %v1310 = vpop.f32.mrf.mxu0
        %v1311 = vadd.f32 0.0, %v1310
        %1312 = vmatmul.f32.gmra.mxu0 %v333
        %v1313 = vpop.f32.mrf.mxu0
        %v1314 = vadd.f32 0.0, %v1313
        %1315 = vmatmul.f32.gmra.mxu0 %v336
        %v1316 = vpop.f32.mrf.mxu0
        %v1317 = vadd.f32 0.0, %v1316
        %1318 = vmatmul.f32.gmra.mxu0 %v339
        %v1319 = vpop.f32.mrf.mxu0
        %v1320 = vadd.f32 0.0, %v1319
        %1321 = vmatmul.f32.gmra.mxu0 %v342
        %v1322 = vpop.f32.mrf.mxu0
        %v1323 = vadd.f32 0.0, %v1322
        %1324 = vmatmul.f32.gmra.mxu0 %v345
        %v1325 = vpop.f32.mrf.mxu0
        %v1326 = vadd.f32 0.0, %v1325
        %1327 = vmatmul.f32.gmra.mxu0 %v348
        %v1328 = vpop.f32.mrf.mxu0
        %v1329 = vadd.f32 0.0, %v1328
        %1330 = vmatmul.f32.gmra.mxu0 %v351
        %v1331 = vpop.f32.mrf.mxu0
        %v1332 = vadd.f32 0.0, %v1331
        %1333 = vmatmul.f32.gmra.mxu0 %v354
        %v1334 = vpop.f32.mrf.mxu0
        %v1335 = vadd.f32 0.0, %v1334
        %1336 = vmatmul.f32.gmra.mxu0 %v357
        %v1337 = vpop.f32.mrf.mxu0
        %v1338 = vadd.f32 0.0, %v1337
        %1339 = vmatmul.f32.gmra.mxu0 %v360
        %v1340 = vpop.f32.mrf.mxu0
        %v1341 = vadd.f32 0.0, %v1340
        %1342 = vmatmul.f32.gmra.mxu0 %v363
        %v1343 = vpop.f32.mrf.mxu0
        %v1344 = vadd.f32 0.0, %v1343
        %1345 = vmatmul.f32.gmra.mxu0 %v366
        %v1346 = vpop.f32.mrf.mxu0
        %v1347 = vadd.f32 0.0, %v1346
        %1348 = vmatmul.f32.gmra.mxu0 %v369
        %v1349 = vpop.f32.mrf.mxu0
        %v1350 = vadd.f32 0.0, %v1349
        %1351 = vmatmul.f32.gmra.mxu0 %v372
        %v1352 = vpop.f32.mrf.mxu0
        %v1353 = vadd.f32 0.0, %v1352
        %1354 = vmatmul.f32.gmra.mxu0 %v375
        %v1355 = vpop.f32.mrf.mxu0
        %v1356 = vadd.f32 0.0, %v1355
        %1357 = vmatmul.f32.gmra.mxu0 %v378
        %v1358 = vpop.f32.mrf.mxu0
        %v1359 = vadd.f32 0.0, %v1358
        %1360 = vmatmul.f32.gmra.mxu0 %v381
        %v1361 = vpop.f32.mrf.mxu0
        %v1362 = vadd.f32 0.0, %v1361
        %1363 = vmatmul.f32.gmra.mxu0 %v384
        %v1364 = vpop.f32.mrf.mxu0
        %v1365 = vadd.f32 0.0, %v1364
        %1366 = vmatmul.f32.gmra.mxu0 %v387
        %v1367 = vpop.f32.mrf.mxu0
        %v1368 = vadd.f32 0.0, %v1367
        %1369 = vmatmul.f32.gmra.mxu0 %v390
        %v1370 = vpop.f32.mrf.mxu0
        %v1371 = vadd.f32 0.0, %v1370
        %1372 = vmatmul.f32.gmra.mxu0 %v393
        %v1373 = vpop.f32.mrf.mxu0
        %v1374 = vadd.f32 0.0, %v1373
        %1375 = vmatmul.f32.gmra.mxu0 %v396
        %v1376 = vpop.f32.mrf.mxu0
        %v1377 = vadd.f32 0.0, %v1376
        %1378 = vmatmul.f32.gmra.mxu0 %v399
        %v1379 = vpop.f32.mrf.mxu0
        %v1380 = vadd.f32 0.0, %v1379
        %1381 = vmatmul.f32.gmra.mxu0 %v402
        %v1382 = vpop.f32.mrf.mxu0
        %v1383 = vadd.f32 0.0, %v1382
        %1384 = vmatmul.f32.gmra.mxu0 %v405
        %v1385 = vpop.f32.mrf.mxu0
        %v1386 = vadd.f32 0.0, %v1385
        %1387 = vmatmul.f32.gmra.mxu0 %v408
        %v1388 = vpop.f32.mrf.mxu0
        %v1389 = vadd.f32 0.0, %v1388
        %1390 = vmatmul.f32.gmra.mxu0 %v411
        %v1391 = vpop.f32.mrf.mxu0
        %v1392 = vadd.f32 0.0, %v1391
        %1393 = vmatmul.f32.gmra.mxu0 %v414
        %v1394 = vpop.f32.mrf.mxu0
        %v1395 = vadd.f32 0.0, %v1394
        %1396 = vdwg.mxu0
        %1397 = vmatpush.msra.mxu0 %v511
        %1398 = vmatpush.msra.mxu0 %v508
        %1399 = vmatpush.msra.mxu0 %v505
        %1400 = vmatpush.msra.mxu0 %v502
        %1401 = vmatpush.msra.mxu0 %v499
        %1402 = vmatpush.msra.mxu0 %v496
        %1403 = vmatpush.msra.mxu0 %v493
        %1404 = vmatpush.msra.mxu0 %v490
        %1405 = vmatpush.msra.mxu0 %v487
        %1406 = vmatpush.msra.mxu0 %v484
        %1407 = vmatpush.msra.mxu0 %v481
        %1408 = vmatpush.msra.mxu0 %v478
        %1409 = vmatpush.msra.mxu0 %v475
        %1410 = vmatpush.msra.mxu0 %v472
        %1411 = vmatpush.msra.mxu0 %v469
        %1412 = vmatpush.msra.mxu0 %v466
        %1413 = vmatmul.f32.gmra.mxu0 %v226
        %v1414 = vpop.f32.mrf.mxu0
        %v1415 = vadd.f32 %v1206, %v1414
        %1416 = vmatmul.f32.gmra.mxu0 %v229
        %v1417 = vpop.f32.mrf.mxu0
        %v1418 = vadd.f32 %v1209, %v1417
        %1419 = vmatmul.f32.gmra.mxu0 %v232
        %v1420 = vpop.f32.mrf.mxu0
        %v1421 = vadd.f32 %v1212, %v1420
        %1422 = vmatmul.f32.gmra.mxu0 %v235
        %v1423 = vpop.f32.mrf.mxu0
        %v1424 = vadd.f32 %v1215, %v1423
        %1425 = vmatmul.f32.gmra.mxu0 %v238
        %v1426 = vpop.f32.mrf.mxu0
        %v1427 = vadd.f32 %v1218, %v1426
        %1428 = vmatmul.f32.gmra.mxu0 %v241
        %v1429 = vpop.f32.mrf.mxu0
        %v1430 = vadd.f32 %v1221, %v1429
        %1431 = vmatmul.f32.gmra.mxu0 %v244
        %v1432 = vpop.f32.mrf.mxu0
        %v1433 = vadd.f32 %v1224, %v1432
        %1434 = vmatmul.f32.gmra.mxu0 %v247
        %v1435 = vpop.f32.mrf.mxu0
        %v1436 = vadd.f32 %v1227, %v1435
        %1437 = vmatmul.f32.gmra.mxu0 %v250
        %v1438 = vpop.f32.mrf.mxu0
        %v1439 = vadd.f32 %v1230, %v1438
        %1440 = vmatmul.f32.gmra.mxu0 %v253
        %v1441 = vpop.f32.mrf.mxu0
        %v1442 = vadd.f32 %v1233, %v1441
        %1443 = vmatmul.f32.gmra.mxu0 %v256
        %v1444 = vpop.f32.mrf.mxu0
        %v1445 = vadd.f32 %v1236, %v1444
        %1446 = vmatmul.f32.gmra.mxu0 %v259
        %v1447 = vpop.f32.mrf.mxu0
        %v1448 = vadd.f32 %v1239, %v1447
        %1449 = vmatmul.f32.gmra.mxu0 %v262
        %v1450 = vpop.f32.mrf.mxu0
        %v1451 = vadd.f32 %v1242, %v1450
        %1452 = vmatmul.f32.gmra.mxu0 %v265
        %v1453 = vpop.f32.mrf.mxu0
        %v1454 = vadd.f32 %v1245, %v1453
        %1455 = vmatmul.f32.gmra.mxu0 %v268
        %v1456 = vpop.f32.mrf.mxu0
        %v1457 = vadd.f32 %v1248, %v1456
        %1458 = vmatmul.f32.gmra.mxu0 %v271
        %v1459 = vpop.f32.mrf.mxu0
        %v1460 = vadd.f32 %v1251, %v1459
        %1461 = vmatmul.f32.gmra.mxu0 %v274
        %v1462 = vpop.f32.mrf.mxu0
        %v1463 = vadd.f32 %v1254, %v1462
        %1464 = vmatmul.f32.gmra.mxu0 %v277
        %v1465 = vpop.f32.mrf.mxu0
        %v1466 = vadd.f32 %v1257, %v1465
        %1467 = vmatmul.f32.gmra.mxu0 %v280
        %v1468 = vpop.f32.mrf.mxu0
        %v1469 = vadd.f32 %v1260, %v1468
        %1470 = vmatmul.f32.gmra.mxu0 %v283
        %v1471 = vpop.f32.mrf.mxu0
        %v1472 = vadd.f32 %v1263, %v1471
        %1473 = vmatmul.f32.gmra.mxu0 %v286
        %v1474 = vpop.f32.mrf.mxu0
        %v1475 = vadd.f32 %v1266, %v1474
        %1476 = vmatmul.f32.gmra.mxu0 %v289
        %v1477 = vpop.f32.mrf.mxu0
        %v1478 = vadd.f32 %v1269, %v1477
        %1479 = vmatmul.f32.gmra.mxu0 %v292
        %v1480 = vpop.f32.mrf.mxu0
        %v1481 = vadd.f32 %v1272, %v1480
        %1482 = vmatmul.f32.gmra.mxu0 %v295
        %v1483 = vpop.f32.mrf.mxu0
        %v1484 = vadd.f32 %v1275, %v1483
        %1485 = vmatmul.f32.gmra.mxu0 %v298
        %v1486 = vpop.f32.mrf.mxu0
        %v1487 = vadd.f32 %v1278, %v1486
        %1488 = vmatmul.f32.gmra.mxu0 %v301
        %v1489 = vpop.f32.mrf.mxu0
        %v1490 = vadd.f32 %v1281, %v1489
        %1491 = vmatmul.f32.gmra.mxu0 %v304
        %v1492 = vpop.f32.mrf.mxu0
        %v1493 = vadd.f32 %v1284, %v1492
        %1494 = vmatmul.f32.gmra.mxu0 %v307
        %v1495 = vpop.f32.mrf.mxu0
        %v1496 = vadd.f32 %v1287, %v1495
        %1497 = vmatmul.f32.gmra.mxu0 %v310
        %v1498 = vpop.f32.mrf.mxu0
        %v1499 = vadd.f32 %v1290, %v1498
        %1500 = vmatmul.f32.gmra.mxu0 %v313
        %v1501 = vpop.f32.mrf.mxu0
        %v1502 = vadd.f32 %v1293, %v1501
        %1503 = vmatmul.f32.gmra.mxu0 %v316
        %v1504 = vpop.f32.mrf.mxu0
        %v1505 = vadd.f32 %v1296, %v1504
        %1506 = vmatmul.f32.gmra.mxu0 %v319
        %v1507 = vpop.f32.mrf.mxu0
        %v1508 = vadd.f32 %v1299, %v1507
        %1509 = vmatmul.f32.gmra.mxu0 %v322
        %v1510 = vpop.f32.mrf.mxu0
        %v1511 = vadd.f32 %v1302, %v1510
        %1512 = vmatmul.f32.gmra.mxu0 %v325
        %v1513 = vpop.f32.mrf.mxu0
        %v1514 = vadd.f32 %v1305, %v1513
        %1515 = vmatmul.f32.gmra.mxu0 %v328
        %v1516 = vpop.f32.mrf.mxu0
        %v1517 = vadd.f32 %v1308, %v1516
        %1518 = vmatmul.f32.gmra.mxu0 %v331
        %v1519 = vpop.f32.mrf.mxu0
        %v1520 = vadd.f32 %v1311, %v1519
        %1521 = vmatmul.f32.gmra.mxu0 %v334
        %v1522 = vpop.f32.mrf.mxu0
        %v1523 = vadd.f32 %v1314, %v1522
        %1524 = vmatmul.f32.gmra.mxu0 %v337
        %v1525 = vpop.f32.mrf.mxu0
        %v1526 = vadd.f32 %v1317, %v1525
        %1527 = vmatmul.f32.gmra.mxu0 %v340
        %v1528 = vpop.f32.mrf.mxu0
        %v1529 = vadd.f32 %v1320, %v1528
        %1530 = vmatmul.f32.gmra.mxu0 %v343
        %v1531 = vpop.f32.mrf.mxu0
        %v1532 = vadd.f32 %v1323, %v1531
        %1533 = vmatmul.f32.gmra.mxu0 %v346
        %v1534 = vpop.f32.mrf.mxu0
        %v1535 = vadd.f32 %v1326, %v1534
        %1536 = vmatmul.f32.gmra.mxu0 %v349
        %v1537 = vpop.f32.mrf.mxu0
        %v1538 = vadd.f32 %v1329, %v1537
        %1539 = vmatmul.f32.gmra.mxu0 %v352
        %v1540 = vpop.f32.mrf.mxu0
        %v1541 = vadd.f32 %v1332, %v1540
        %1542 = vmatmul.f32.gmra.mxu0 %v355
        %v1543 = vpop.f32.mrf.mxu0
        %v1544 = vadd.f32 %v1335, %v1543
        %1545 = vmatmul.f32.gmra.mxu0 %v358
        %v1546 = vpop.f32.mrf.mxu0
        %v1547 = vadd.f32 %v1338, %v1546
        %1548 = vmatmul.f32.gmra.mxu0 %v361
        %v1549 = vpop.f32.mrf.mxu0
        %v1550 = vadd.f32 %v1341, %v1549
        %1551 = vmatmul.f32.gmra.mxu0 %v364
        %v1552 = vpop.f32.mrf.mxu0
        %v1553 = vadd.f32 %v1344, %v1552
        %1554 = vmatmul.f32.gmra.mxu0 %v367
        %v1555 = vpop.f32.mrf.mxu0
        %v1556 = vadd.f32 %v1347, %v1555
        %1557 = vmatmul.f32.gmra.mxu0 %v370
        %v1558 = vpop.f32.mrf.mxu0
        %v1559 = vadd.f32 %v1350, %v1558
        %1560 = vmatmul.f32.gmra.mxu0 %v373
        %v1561 = vpop.f32.mrf.mxu0
        %v1562 = vadd.f32 %v1353, %v1561
        %1563 = vmatmul.f32.gmra.mxu0 %v376
        %v1564 = vpop.f32.mrf.mxu0
        %v1565 = vadd.f32 %v1356, %v1564
        %1566 = vmatmul.f32.gmra.mxu0 %v379
        %v1567 = vpop.f32.mrf.mxu0
        %v1568 = vadd.f32 %v1359, %v1567
        %1569 = vmatmul.f32.gmra.mxu0 %v382
        %v1570 = vpop.f32.mrf.mxu0
        %v1571 = vadd.f32 %v1362, %v1570
        %1572 = vmatmul.f32.gmra.mxu0 %v385
        %v1573 = vpop.f32.mrf.mxu0
        %v1574 = vadd.f32 %v1365, %v1573
        %1575 = vmatmul.f32.gmra.mxu0 %v388
        %v1576 = vpop.f32.mrf.mxu0
        %v1577 = vadd.f32 %v1368, %v1576
        %1578 = vmatmul.f32.gmra.mxu0 %v391
        %v1579 = vpop.f32.mrf.mxu0
        %v1580 = vadd.f32 %v1371, %v1579
        %1581 = vmatmul.f32.gmra.mxu0 %v394
        %v1582 = vpop.f32.mrf.mxu0
        %v1583 = vadd.f32 %v1374, %v1582
        %1584 = vmatmul.f32.gmra.mxu0 %v397
        %v1585 = vpop.f32.mrf.mxu0
        %v1586 = vadd.f32 %v1377, %v1585
        %1587 = vmatmul.f32.gmra.mxu0 %v400
        %v1588 = vpop.f32.mrf.mxu0
        %v1589 = vadd.f32 %v1380, %v1588
        %1590 = vmatmul.f32.gmra.mxu0 %v403
        %v1591 = vpop.f32.mrf.mxu0
        %v1592 = vadd.f32 %v1383, %v1591
        %1593 = vmatmul.f32.gmra.mxu0 %v406
        %v1594 = vpop.f32.mrf.mxu0
        %v1595 = vadd.f32 %v1386, %v1594
        %1596 = vmatmul.f32.gmra.mxu0 %v409
        %v1597 = vpop.f32.mrf.mxu0
        %v1598 = vadd.f32 %v1389, %v1597
        %1599 = vmatmul.f32.gmra.mxu0 %v412
        %v1600 = vpop.f32.mrf.mxu0
        %v1601 = vadd.f32 %v1392, %v1600
        %1602 = vmatmul.f32.gmra.mxu0 %v415
        %v1603 = vpop.f32.mrf.mxu0
        %v1604 = vadd.f32 %v1395, %v1603
        %1605 = vdwg.mxu0
        %1606 = vmatpush.msra.mxu0 %v559
        %1607 = vmatpush.msra.mxu0 %v556
        %1608 = vmatpush.msra.mxu0 %v553
        %1609 = vmatpush.msra.mxu0 %v550
        %1610 = vmatpush.msra.mxu0 %v547
        %1611 = vmatpush.msra.mxu0 %v544
        %1612 = vmatpush.msra.mxu0 %v541
        %1613 = vmatpush.msra.mxu0 %v538
        %1614 = vmatpush.msra.mxu0 %v535
        %1615 = vmatpush.msra.mxu0 %v532
        %1616 = vmatpush.msra.mxu0 %v529
        %1617 = vmatpush.msra.mxu0 %v526
        %1618 = vmatpush.msra.mxu0 %v523
        %1619 = vmatpush.msra.mxu0 %v520
        %1620 = vmatpush.msra.mxu0 %v517
        %1621 = vmatpush.msra.mxu0 %v514
        %1622 = vmatmul.f32.gmra.mxu0 %v227
        %v1623 = vpop.f32.mrf.mxu0
        %v1624 = vadd.f32 %v1415, %v1623
        %1625 = vmatmul.f32.gmra.mxu0 %v230
        %v1626 = vpop.f32.mrf.mxu0
        %v1627 = vadd.f32 %v1418, %v1626
        %1628 = vmatmul.f32.gmra.mxu0 %v233
        %v1629 = vpop.f32.mrf.mxu0
        %v1630 = vadd.f32 %v1421, %v1629
        %1631 = vmatmul.f32.gmra.mxu0 %v236
        %v1632 = vpop.f32.mrf.mxu0
        %v1633 = vadd.f32 %v1424, %v1632
        %1634 = vmatmul.f32.gmra.mxu0 %v239
        %v1635 = vpop.f32.mrf.mxu0
        %v1636 = vadd.f32 %v1427, %v1635
        %1637 = vmatmul.f32.gmra.mxu0 %v242
        %v1638 = vpop.f32.mrf.mxu0
        %v1639 = vadd.f32 %v1430, %v1638
        %1640 = vmatmul.f32.gmra.mxu0 %v245
        %v1641 = vpop.f32.mrf.mxu0
        %v1642 = vadd.f32 %v1433, %v1641
        %1643 = vmatmul.f32.gmra.mxu0 %v248
        %v1644 = vpop.f32.mrf.mxu0
        %v1645 = vadd.f32 %v1436, %v1644
        %1646 = vmatmul.f32.gmra.mxu0 %v251
        %v1647 = vpop.f32.mrf.mxu0
        %v1648 = vadd.f32 %v1439, %v1647
        %1649 = vmatmul.f32.gmra.mxu0 %v254
        %v1650 = vpop.f32.mrf.mxu0
        %v1651 = vadd.f32 %v1442, %v1650
        %1652 = vmatmul.f32.gmra.mxu0 %v257
        %v1653 = vpop.f32.mrf.mxu0
        %v1654 = vadd.f32 %v1445, %v1653
        %1655 = vmatmul.f32.gmra.mxu0 %v260
        %v1656 = vpop.f32.mrf.mxu0
        %v1657 = vadd.f32 %v1448, %v1656
        %1658 = vmatmul.f32.gmra.mxu0 %v263
        %v1659 = vpop.f32.mrf.mxu0
        %v1660 = vadd.f32 %v1451, %v1659
        %1661 = vmatmul.f32.gmra.mxu0 %v266
        %v1662 = vpop.f32.mrf.mxu0
        %v1663 = vadd.f32 %v1454, %v1662
        %1664 = vmatmul.f32.gmra.mxu0 %v269
        %v1665 = vpop.f32.mrf.mxu0
        %v1666 = vadd.f32 %v1457, %v1665
        %1667 = vmatmul.f32.gmra.mxu0 %v272
        %v1668 = vpop.f32.mrf.mxu0
        %v1669 = vadd.f32 %v1460, %v1668
        %1670 = vmatmul.f32.gmra.mxu0 %v275
        %v1671 = vpop.f32.mrf.mxu0
        %v1672 = vadd.f32 %v1463, %v1671
        %1673 = vmatmul.f32.gmra.mxu0 %v278
        %v1674 = vpop.f32.mrf.mxu0
        %v1675 = vadd.f32 %v1466, %v1674
        %1676 = vmatmul.f32.gmra.mxu0 %v281
        %v1677 = vpop.f32.mrf.mxu0
        %v1678 = vadd.f32 %v1469, %v1677
        %1679 = vmatmul.f32.gmra.mxu0 %v284
        %v1680 = vpop.f32.mrf.mxu0
        %v1681 = vadd.f32 %v1472, %v1680
        %1682 = vmatmul.f32.gmra.mxu0 %v287
        %v1683 = vpop.f32.mrf.mxu0
        %v1684 = vadd.f32 %v1475, %v1683
        %1685 = vmatmul.f32.gmra.mxu0 %v290
        %v1686 = vpop.f32.mrf.mxu0
        %v1687 = vadd.f32 %v1478, %v1686
        %1688 = vmatmul.f32.gmra.mxu0 %v293
        %v1689 = vpop.f32.mrf.mxu0
        %v1690 = vadd.f32 %v1481, %v1689
        %1691 = vmatmul.f32.gmra.mxu0 %v296
        %v1692 = vpop.f32.mrf.mxu0
        %v1693 = vadd.f32 %v1484, %v1692
        %1694 = vmatmul.f32.gmra.mxu0 %v299
        %v1695 = vpop.f32.mrf.mxu0
        %v1696 = vadd.f32 %v1487, %v1695
        %1697 = vmatmul.f32.gmra.mxu0 %v302
        %v1698 = vpop.f32.mrf.mxu0
        %v1699 = vadd.f32 %v1490, %v1698
        %1700 = vmatmul.f32.gmra.mxu0 %v305
        %v1701 = vpop.f32.mrf.mxu0
        %v1702 = vadd.f32 %v1493, %v1701
        %1703 = vmatmul.f32.gmra.mxu0 %v308
        %v1704 = vpop.f32.mrf.mxu0
        %v1705 = vadd.f32 %v1496, %v1704
        %1706 = vmatmul.f32.gmra.mxu0 %v311
        %v1707 = vpop.f32.mrf.mxu0
        %v1708 = vadd.f32 %v1499, %v1707
        %1709 = vmatmul.f32.gmra.mxu0 %v314
        %v1710 = vpop.f32.mrf.mxu0
        %v1711 = vadd.f32 %v1502, %v1710
        %1712 = vmatmul.f32.gmra.mxu0 %v317
        %v1713 = vpop.f32.mrf.mxu0
        %v1714 = vadd.f32 %v1505, %v1713
        %1715 = vmatmul.f32.gmra.mxu0 %v320
        %v1716 = vpop.f32.mrf.mxu0
        %v1717 = vadd.f32 %v1508, %v1716
        %1718 = vmatmul.f32.gmra.mxu0 %v323
        %v1719 = vpop.f32.mrf.mxu0
        %v1720 = vadd.f32 %v1511, %v1719
        %1721 = vmatmul.f32.gmra.mxu0 %v326
        %v1722 = vpop.f32.mrf.mxu0
        %v1723 = vadd.f32 %v1514, %v1722
        %1724 = vmatmul.f32.gmra.mxu0 %v329
        %v1725 = vpop.f32.mrf.mxu0
        %v1726 = vadd.f32 %v1517, %v1725
        %1727 = vmatmul.f32.gmra.mxu0 %v332
        %v1728 = vpop.f32.mrf.mxu0
        %v1729 = vadd.f32 %v1520, %v1728
        %1730 = vmatmul.f32.gmra.mxu0 %v335
        %v1731 = vpop.f32.mrf.mxu0
        %v1732 = vadd.f32 %v1523, %v1731
        %1733 = vmatmul.f32.gmra.mxu0 %v338
        %v1734 = vpop.f32.mrf.mxu0
        %v1735 = vadd.f32 %v1526, %v1734
        %1736 = vmatmul.f32.gmra.mxu0 %v341
        %v1737 = vpop.f32.mrf.mxu0
        %v1738 = vadd.f32 %v1529, %v1737
        %1739 = vmatmul.f32.gmra.mxu0 %v344
        %v1740 = vpop.f32.mrf.mxu0
        %v1741 = vadd.f32 %v1532, %v1740
        %1742 = vmatmul.f32.gmra.mxu0 %v347
        %v1743 = vpop.f32.mrf.mxu0
        %v1744 = vadd.f32 %v1535, %v1743
        %1745 = vmatmul.f32.gmra.mxu0 %v350
        %v1746 = vpop.f32.mrf.mxu0
        %v1747 = vadd.f32 %v1538, %v1746
        %1748 = vmatmul.f32.gmra.mxu0 %v353
        %v1749 = vpop.f32.mrf.mxu0
        %v1750 = vadd.f32 %v1541, %v1749
        %1751 = vmatmul.f32.gmra.mxu0 %v356
        %v1752 = vpop.f32.mrf.mxu0
        %v1753 = vadd.f32 %v1544, %v1752
        %1754 = vmatmul.f32.gmra.mxu0 %v359
        %v1755 = vpop.f32.mrf.mxu0
        %v1756 = vadd.f32 %v1547, %v1755
        %1757 = vmatmul.f32.gmra.mxu0 %v362
        %v1758 = vpop.f32.mrf.mxu0
        %v1759 = vadd.f32 %v1550, %v1758
        %1760 = vmatmul.f32.gmra.mxu0 %v365
        %v1761 = vpop.f32.mrf.mxu0
        %v1762 = vadd.f32 %v1553, %v1761
        %1763 = vmatmul.f32.gmra.mxu0 %v368
        %v1764 = vpop.f32.mrf.mxu0
        %v1765 = vadd.f32 %v1556, %v1764
        %1766 = vmatmul.f32.gmra.mxu0 %v371
        %v1767 = vpop.f32.mrf.mxu0
        %v1768 = vadd.f32 %v1559, %v1767
        %1769 = vmatmul.f32.gmra.mxu0 %v374
        %v1770 = vpop.f32.mrf.mxu0
        %v1771 = vadd.f32 %v1562, %v1770
        %1772 = vmatmul.f32.gmra.mxu0 %v377
        %v1773 = vpop.f32.mrf.mxu0
        %v1774 = vadd.f32 %v1565, %v1773
        %1775 = vmatmul.f32.gmra.mxu0 %v380
        %v1776 = vpop.f32.mrf.mxu0
        %v1777 = vadd.f32 %v1568, %v1776
        %1778 = vmatmul.f32.gmra.mxu0 %v383
        %v1779 = vpop.f32.mrf.mxu0
        %v1780 = vadd.f32 %v1571, %v1779
        %1781 = vmatmul.f32.gmra.mxu0 %v386
        %v1782 = vpop.f32.mrf.mxu0
        %v1783 = vadd.f32 %v1574, %v1782
        %1784 = vmatmul.f32.gmra.mxu0 %v389
        %v1785 = vpop.f32.mrf.mxu0
        %v1786 = vadd.f32 %v1577, %v1785
        %1787 = vmatmul.f32.gmra.mxu0 %v392
        %v1788 = vpop.f32.mrf.mxu0
        %v1789 = vadd.f32 %v1580, %v1788
        %1790 = vmatmul.f32.gmra.mxu0 %v395
        %v1791 = vpop.f32.mrf.mxu0
        %v1792 = vadd.f32 %v1583, %v1791
        %1793 = vmatmul.f32.gmra.mxu0 %v398
        %v1794 = vpop.f32.mrf.mxu0
        %v1795 = vadd.f32 %v1586, %v1794
        %1796 = vmatmul.f32.gmra.mxu0 %v401
        %v1797 = vpop.f32.mrf.mxu0
        %v1798 = vadd.f32 %v1589, %v1797
        %1799 = vmatmul.f32.gmra.mxu0 %v404
        %v1800 = vpop.f32.mrf.mxu0
        %v1801 = vadd.f32 %v1592, %v1800
        %1802 = vmatmul.f32.gmra.mxu0 %v407
        %v1803 = vpop.f32.mrf.mxu0
        %v1804 = vadd.f32 %v1595, %v1803
        %1805 = vmatmul.f32.gmra.mxu0 %v410
        %v1806 = vpop.f32.mrf.mxu0
        %v1807 = vadd.f32 %v1598, %v1806
        %1808 = vmatmul.f32.gmra.mxu0 %v413
        %v1809 = vpop.f32.mrf.mxu0
        %v1810 = vadd.f32 %v1601, %v1809
        %1811 = vmatmul.f32.gmra.mxu0 %v416
        %v1812 = vpop.f32.mrf.mxu0
        %v1813 = vadd.f32 %v1604, %v1812
        %1814 = vdwg.mxu0
        %1815 = vmatpush.msra.mxu0 %v464
        %1816 = vmatpush.msra.mxu0 %v461
        %1817 = vmatpush.msra.mxu0 %v458
        %1818 = vmatpush.msra.mxu0 %v455
        %1819 = vmatpush.msra.mxu0 %v452
        %1820 = vmatpush.msra.mxu0 %v449
        %1821 = vmatpush.msra.mxu0 %v446
        %1822 = vmatpush.msra.mxu0 %v443
        %1823 = vmatpush.msra.mxu0 %v440
        %1824 = vmatpush.msra.mxu0 %v437
        %1825 = vmatpush.msra.mxu0 %v434
        %1826 = vmatpush.msra.mxu0 %v431
        %1827 = vmatpush.msra.mxu0 %v428
        %1828 = vmatpush.msra.mxu0 %v425
        %1829 = vmatpush.msra.mxu0 %v422
        %1830 = vmatpush.msra.mxu0 %v419
        %1831 = vmatmul.f32.gmra.mxu0 %v225
        %v1832 = vpop.f32.mrf.mxu0
        %v1833 = vadd.f32 0.0, %v1832
        %1834 = vmatmul.f32.gmra.mxu0 %v228
        %v1835 = vpop.f32.mrf.mxu0
        %v1836 = vadd.f32 0.0, %v1835
        %1837 = vmatmul.f32.gmra.mxu0 %v231
        %v1838 = vpop.f32.mrf.mxu0
        %v1839 = vadd.f32 0.0, %v1838
        %1840 = vmatmul.f32.gmra.mxu0 %v234
        %v1841 = vpop.f32.mrf.mxu0
        %v1842 = vadd.f32 0.0, %v1841
        %1843 = vmatmul.f32.gmra.mxu0 %v237
        %v1844 = vpop.f32.mrf.mxu0
        %v1845 = vadd.f32 0.0, %v1844
        %1846 = vmatmul.f32.gmra.mxu0 %v240
        %v1847 = vpop.f32.mrf.mxu0
        %v1848 = vadd.f32 0.0, %v1847
        %1849 = vmatmul.f32.gmra.mxu0 %v243
        %v1850 = vpop.f32.mrf.mxu0
        %v1851 = vadd.f32 0.0, %v1850
        %1852 = vmatmul.f32.gmra.mxu0 %v246
        %v1853 = vpop.f32.mrf.mxu0
        %v1854 = vadd.f32 0.0, %v1853
        %1855 = vmatmul.f32.gmra.mxu0 %v249
        %v1856 = vpop.f32.mrf.mxu0
        %v1857 = vadd.f32 0.0, %v1856
        %1858 = vmatmul.f32.gmra.mxu0 %v252
        %v1859 = vpop.f32.mrf.mxu0
        %v1860 = vadd.f32 0.0, %v1859
        %1861 = vmatmul.f32.gmra.mxu0 %v255
        %v1862 = vpop.f32.mrf.mxu0
        %v1863 = vadd.f32 0.0, %v1862
        %1864 = vmatmul.f32.gmra.mxu0 %v258
        %v1865 = vpop.f32.mrf.mxu0
        %v1866 = vadd.f32 0.0, %v1865
        %1867 = vmatmul.f32.gmra.mxu0 %v261
        %v1868 = vpop.f32.mrf.mxu0
        %v1869 = vadd.f32 0.0, %v1868
        %1870 = vmatmul.f32.gmra.mxu0 %v264
        %v1871 = vpop.f32.mrf.mxu0
        %v1872 = vadd.f32 0.0, %v1871
        %1873 = vmatmul.f32.gmra.mxu0 %v267
        %v1874 = vpop.f32.mrf.mxu0
        %v1875 = vadd.f32 0.0, %v1874
        %1876 = vmatmul.f32.gmra.mxu0 %v270
        %v1877 = vpop.f32.mrf.mxu0
        %v1878 = vadd.f32 0.0, %v1877
        %1879 = vmatmul.f32.gmra.mxu0 %v273
        %v1880 = vpop.f32.mrf.mxu0
        %v1881 = vadd.f32 0.0, %v1880
        %1882 = vmatmul.f32.gmra.mxu0 %v276
        %v1883 = vpop.f32.mrf.mxu0
        %v1884 = vadd.f32 0.0, %v1883
        %1885 = vmatmul.f32.gmra.mxu0 %v279
        %v1886 = vpop.f32.mrf.mxu0
        %v1887 = vadd.f32 0.0, %v1886
        %1888 = vmatmul.f32.gmra.mxu0 %v282
        %v1889 = vpop.f32.mrf.mxu0
        %v1890 = vadd.f32 0.0, %v1889
        %1891 = vmatmul.f32.gmra.mxu0 %v285
        %v1892 = vpop.f32.mrf.mxu0
        %v1893 = vadd.f32 0.0, %v1892
        %1894 = vmatmul.f32.gmra.mxu0 %v288
        %v1895 = vpop.f32.mrf.mxu0
        %v1896 = vadd.f32 0.0, %v1895
        %1897 = vmatmul.f32.gmra.mxu0 %v291
        %v1898 = vpop.f32.mrf.mxu0
        %v1899 = vadd.f32 0.0, %v1898
        %1900 = vmatmul.f32.gmra.mxu0 %v294
        %v1901 = vpop.f32.mrf.mxu0
        %v1902 = vadd.f32 0.0, %v1901
        %1903 = vmatmul.f32.gmra.mxu0 %v297
        %v1904 = vpop.f32.mrf.mxu0
        %v1905 = vadd.f32 0.0, %v1904
        %1906 = vmatmul.f32.gmra.mxu0 %v300
        %v1907 = vpop.f32.mrf.mxu0
        %v1908 = vadd.f32 0.0, %v1907
        %1909 = vmatmul.f32.gmra.mxu0 %v303
        %v1910 = vpop.f32.mrf.mxu0
        %v1911 = vadd.f32 0.0, %v1910
        %1912 = vmatmul.f32.gmra.mxu0 %v306
        %v1913 = vpop.f32.mrf.mxu0
        %v1914 = vadd.f32 0.0, %v1913
        %1915 = vmatmul.f32.gmra.mxu0 %v309
        %v1916 = vpop.f32.mrf.mxu0
        %v1917 = vadd.f32 0.0, %v1916
        %1918 = vmatmul.f32.gmra.mxu0 %v312
        %v1919 = vpop.f32.mrf.mxu0
        %v1920 = vadd.f32 0.0, %v1919
        %1921 = vmatmul.f32.gmra.mxu0 %v315
        %v1922 = vpop.f32.mrf.mxu0
        %v1923 = vadd.f32 0.0, %v1922
        %1924 = vmatmul.f32.gmra.mxu0 %v318
        %v1925 = vpop.f32.mrf.mxu0
        %v1926 = vadd.f32 0.0, %v1925
        %1927 = vmatmul.f32.gmra.mxu0 %v321
        %v1928 = vpop.f32.mrf.mxu0
        %v1929 = vadd.f32 0.0, %v1928
        %1930 = vmatmul.f32.gmra.mxu0 %v324
        %v1931 = vpop.f32.mrf.mxu0
        %v1932 = vadd.f32 0.0, %v1931
        %1933 = vmatmul.f32.gmra.mxu0 %v327
        %v1934 = vpop.f32.mrf.mxu0
        %v1935 = vadd.f32 0.0, %v1934
        %1936 = vmatmul.f32.gmra.mxu0 %v330
        %v1937 = vpop.f32.mrf.mxu0
        %v1938 = vadd.f32 0.0, %v1937
        %1939 = vmatmul.f32.gmra.mxu0 %v333
        %v1940 = vpop.f32.mrf.mxu0
        %v1941 = vadd.f32 0.0, %v1940
        %1942 = vmatmul.f32.gmra.mxu0 %v336
        %v1943 = vpop.f32.mrf.mxu0
        %v1944 = vadd.f32 0.0, %v1943
        %1945 = vmatmul.f32.gmra.mxu0 %v339
        %v1946 = vpop.f32.mrf.mxu0
        %v1947 = vadd.f32 0.0, %v1946
        %1948 = vmatmul.f32.gmra.mxu0 %v342
        %v1949 = vpop.f32.mrf.mxu0
        %v1950 = vadd.f32 0.0, %v1949
        %1951 = vmatmul.f32.gmra.mxu0 %v345
        %v1952 = vpop.f32.mrf.mxu0
        %v1953 = vadd.f32 0.0, %v1952
        %1954 = vmatmul.f32.gmra.mxu0 %v348
        %v1955 = vpop.f32.mrf.mxu0
        %v1956 = vadd.f32 0.0, %v1955
        %1957 = vmatmul.f32.gmra.mxu0 %v351
        %v1958 = vpop.f32.mrf.mxu0
        %v1959 = vadd.f32 0.0, %v1958
        %1960 = vmatmul.f32.gmra.mxu0 %v354
        %v1961 = vpop.f32.mrf.mxu0
        %v1962 = vadd.f32 0.0, %v1961
        %1963 = vmatmul.f32.gmra.mxu0 %v357
        %v1964 = vpop.f32.mrf.mxu0
        %v1965 = vadd.f32 0.0, %v1964
        %1966 = vmatmul.f32.gmra.mxu0 %v360
        %v1967 = vpop.f32.mrf.mxu0
        %v1968 = vadd.f32 0.0, %v1967
        %1969 = vmatmul.f32.gmra.mxu0 %v363
        %v1970 = vpop.f32.mrf.mxu0
        %v1971 = vadd.f32 0.0, %v1970
        %1972 = vmatmul.f32.gmra.mxu0 %v366
        %v1973 = vpop.f32.mrf.mxu0
        %v1974 = vadd.f32 0.0, %v1973
        %1975 = vmatmul.f32.gmra.mxu0 %v369
        %v1976 = vpop.f32.mrf.mxu0
        %v1977 = vadd.f32 0.0, %v1976
        %1978 = vmatmul.f32.gmra.mxu0 %v372
        %v1979 = vpop.f32.mrf.mxu0
        %v1980 = vadd.f32 0.0, %v1979
        %1981 = vmatmul.f32.gmra.mxu0 %v375
        %v1982 = vpop.f32.mrf.mxu0
        %v1983 = vadd.f32 0.0, %v1982
        %1984 = vmatmul.f32.gmra.mxu0 %v378
        %v1985 = vpop.f32.mrf.mxu0
        %v1986 = vadd.f32 0.0, %v1985
        %1987 = vmatmul.f32.gmra.mxu0 %v381
        %v1988 = vpop.f32.mrf.mxu0
        %v1989 = vadd.f32 0.0, %v1988
        %1990 = vmatmul.f32.gmra.mxu0 %v384
        %v1991 = vpop.f32.mrf.mxu0
        %v1992 = vadd.f32 0.0, %v1991
        %1993 = vmatmul.f32.gmra.mxu0 %v387
        %v1994 = vpop.f32.mrf.mxu0
        %v1995 = vadd.f32 0.0, %v1994
        %1996 = vmatmul.f32.gmra.mxu0 %v390
        %v1997 = vpop.f32.mrf.mxu0
        %v1998 = vadd.f32 0.0, %v1997
        %1999 = vmatmul.f32.gmra.mxu0 %v393
        %v2000 = vpop.f32.mrf.mxu0
        %v2001 = vadd.f32 0.0, %v2000
        %2002 = vmatmul.f32.gmra.mxu0 %v396
        %v2003 = vpop.f32.mrf.mxu0
        %v2004 = vadd.f32 0.0, %v2003
        %2005 = vmatmul.f32.gmra.mxu0 %v399
        %v2006 = vpop.f32.mrf.mxu0
        %v2007 = vadd.f32 0.0, %v2006
        %2008 = vmatmul.f32.gmra.mxu0 %v402
        %v2009 = vpop.f32.mrf.mxu0
        %v2010 = vadd.f32 0.0, %v2009
        %2011 = vmatmul.f32.gmra.mxu0 %v405
        %v2012 = vpop.f32.mrf.mxu0
        %v2013 = vadd.f32 0.0, %v2012
        %2014 = vmatmul.f32.gmra.mxu0 %v408
        %v2015 = vpop.f32.mrf.mxu0
        %v2016 = vadd.f32 0.0, %v2015
        %2017 = vmatmul.f32.gmra.mxu0 %v411
        %v2018 = vpop.f32.mrf.mxu0
        %v2019 = vadd.f32 0.0, %v2018
        %2020 = vmatmul.f32.gmra.mxu0 %v414
        %v2021 = vpop.f32.mrf.mxu0
        %v2022 = vadd.f32 0.0, %v2021
        %2023 = vdwg.mxu0
        %2024 = vmatpush.msra.mxu0 %v512
        %2025 = vmatpush.msra.mxu0 %v509
        %2026 = vmatpush.msra.mxu0 %v506
        %2027 = vmatpush.msra.mxu0 %v503
        %2028 = vmatpush.msra.mxu0 %v500
        %2029 = vmatpush.msra.mxu0 %v497
        %2030 = vmatpush.msra.mxu0 %v494
        %2031 = vmatpush.msra.mxu0 %v491
        %2032 = vmatpush.msra.mxu0 %v488
        %2033 = vmatpush.msra.mxu0 %v485
        %2034 = vmatpush.msra.mxu0 %v482
        %2035 = vmatpush.msra.mxu0 %v479
        %2036 = vmatpush.msra.mxu0 %v476
        %2037 = vmatpush.msra.mxu0 %v473
        %2038 = vmatpush.msra.mxu0 %v470
        %2039 = vmatpush.msra.mxu0 %v467
        %2040 = vmatmul.f32.gmra.mxu0 %v226
        %v2041 = vpop.f32.mrf.mxu0
        %v2042 = vadd.f32 %v1833, %v2041
        %2043 = vmatmul.f32.gmra.mxu0 %v229
        %v2044 = vpop.f32.mrf.mxu0
        %v2045 = vadd.f32 %v1836, %v2044
        %2046 = vmatmul.f32.gmra.mxu0 %v232
        %v2047 = vpop.f32.mrf.mxu0
        %v2048 = vadd.f32 %v1839, %v2047
        %2049 = vmatmul.f32.gmra.mxu0 %v235
        %v2050 = vpop.f32.mrf.mxu0
        %v2051 = vadd.f32 %v1842, %v2050
        %2052 = vmatmul.f32.gmra.mxu0 %v238
        %v2053 = vpop.f32.mrf.mxu0
        %v2054 = vadd.f32 %v1845, %v2053
        %2055 = vmatmul.f32.gmra.mxu0 %v241
        %v2056 = vpop.f32.mrf.mxu0
        %v2057 = vadd.f32 %v1848, %v2056
        %2058 = vmatmul.f32.gmra.mxu0 %v244
        %v2059 = vpop.f32.mrf.mxu0
        %v2060 = vadd.f32 %v1851, %v2059
        %2061 = vmatmul.f32.gmra.mxu0 %v247
        %v2062 = vpop.f32.mrf.mxu0
        %v2063 = vadd.f32 %v1854, %v2062
        %2064 = vmatmul.f32.gmra.mxu0 %v250
        %v2065 = vpop.f32.mrf.mxu0
        %v2066 = vadd.f32 %v1857, %v2065
        %2067 = vmatmul.f32.gmra.mxu0 %v253
        %v2068 = vpop.f32.mrf.mxu0
        %v2069 = vadd.f32 %v1860, %v2068
        %2070 = vmatmul.f32.gmra.mxu0 %v256
        %v2071 = vpop.f32.mrf.mxu0
        %v2072 = vadd.f32 %v1863, %v2071
        %2073 = vmatmul.f32.gmra.mxu0 %v259
        %v2074 = vpop.f32.mrf.mxu0
        %v2075 = vadd.f32 %v1866, %v2074
        %2076 = vmatmul.f32.gmra.mxu0 %v262
        %v2077 = vpop.f32.mrf.mxu0
        %v2078 = vadd.f32 %v1869, %v2077
        %2079 = vmatmul.f32.gmra.mxu0 %v265
        %v2080 = vpop.f32.mrf.mxu0
        %v2081 = vadd.f32 %v1872, %v2080
        %2082 = vmatmul.f32.gmra.mxu0 %v268
        %v2083 = vpop.f32.mrf.mxu0
        %v2084 = vadd.f32 %v1875, %v2083
        %2085 = vmatmul.f32.gmra.mxu0 %v271
        %v2086 = vpop.f32.mrf.mxu0
        %v2087 = vadd.f32 %v1878, %v2086
        %2088 = vmatmul.f32.gmra.mxu0 %v274
        %v2089 = vpop.f32.mrf.mxu0
        %v2090 = vadd.f32 %v1881, %v2089
        %2091 = vmatmul.f32.gmra.mxu0 %v277
        %v2092 = vpop.f32.mrf.mxu0
        %v2093 = vadd.f32 %v1884, %v2092
        %2094 = vmatmul.f32.gmra.mxu0 %v280
        %v2095 = vpop.f32.mrf.mxu0
        %v2096 = vadd.f32 %v1887, %v2095
        %2097 = vmatmul.f32.gmra.mxu0 %v283
        %v2098 = vpop.f32.mrf.mxu0
        %v2099 = vadd.f32 %v1890, %v2098
        %2100 = vmatmul.f32.gmra.mxu0 %v286
        %v2101 = vpop.f32.mrf.mxu0
        %v2102 = vadd.f32 %v1893, %v2101
        %2103 = vmatmul.f32.gmra.mxu0 %v289
        %v2104 = vpop.f32.mrf.mxu0
        %v2105 = vadd.f32 %v1896, %v2104
        %2106 = vmatmul.f32.gmra.mxu0 %v292
        %v2107 = vpop.f32.mrf.mxu0
        %v2108 = vadd.f32 %v1899, %v2107
        %2109 = vmatmul.f32.gmra.mxu0 %v295
        %v2110 = vpop.f32.mrf.mxu0
        %v2111 = vadd.f32 %v1902, %v2110
        %2112 = vmatmul.f32.gmra.mxu0 %v298
        %v2113 = vpop.f32.mrf.mxu0
        %v2114 = vadd.f32 %v1905, %v2113
        %2115 = vmatmul.f32.gmra.mxu0 %v301
        %v2116 = vpop.f32.mrf.mxu0
        %v2117 = vadd.f32 %v1908, %v2116
        %2118 = vmatmul.f32.gmra.mxu0 %v304
        %v2119 = vpop.f32.mrf.mxu0
        %v2120 = vadd.f32 %v1911, %v2119
        %2121 = vmatmul.f32.gmra.mxu0 %v307
        %v2122 = vpop.f32.mrf.mxu0
        %v2123 = vadd.f32 %v1914, %v2122
        %2124 = vmatmul.f32.gmra.mxu0 %v310
        %v2125 = vpop.f32.mrf.mxu0
        %v2126 = vadd.f32 %v1917, %v2125
        %2127 = vmatmul.f32.gmra.mxu0 %v313
        %v2128 = vpop.f32.mrf.mxu0
        %v2129 = vadd.f32 %v1920, %v2128
        %2130 = vmatmul.f32.gmra.mxu0 %v316
        %v2131 = vpop.f32.mrf.mxu0
        %v2132 = vadd.f32 %v1923, %v2131
        %2133 = vmatmul.f32.gmra.mxu0 %v319
        %v2134 = vpop.f32.mrf.mxu0
        %v2135 = vadd.f32 %v1926, %v2134
        %2136 = vmatmul.f32.gmra.mxu0 %v322
        %v2137 = vpop.f32.mrf.mxu0
        %v2138 = vadd.f32 %v1929, %v2137
        %2139 = vmatmul.f32.gmra.mxu0 %v325
        %v2140 = vpop.f32.mrf.mxu0
        %v2141 = vadd.f32 %v1932, %v2140
        %2142 = vmatmul.f32.gmra.mxu0 %v328
        %v2143 = vpop.f32.mrf.mxu0
        %v2144 = vadd.f32 %v1935, %v2143
        %2145 = vmatmul.f32.gmra.mxu0 %v331
        %v2146 = vpop.f32.mrf.mxu0
        %v2147 = vadd.f32 %v1938, %v2146
        %2148 = vmatmul.f32.gmra.mxu0 %v334
        %v2149 = vpop.f32.mrf.mxu0
        %v2150 = vadd.f32 %v1941, %v2149
        %2151 = vmatmul.f32.gmra.mxu0 %v337
        %v2152 = vpop.f32.mrf.mxu0
        %v2153 = vadd.f32 %v1944, %v2152
        %2154 = vmatmul.f32.gmra.mxu0 %v340
        %v2155 = vpop.f32.mrf.mxu0
        %v2156 = vadd.f32 %v1947, %v2155
        %2157 = vmatmul.f32.gmra.mxu0 %v343
        %v2158 = vpop.f32.mrf.mxu0
        %v2159 = vadd.f32 %v1950, %v2158
        %2160 = vmatmul.f32.gmra.mxu0 %v346
        %v2161 = vpop.f32.mrf.mxu0
        %v2162 = vadd.f32 %v1953, %v2161
        %2163 = vmatmul.f32.gmra.mxu0 %v349
        %v2164 = vpop.f32.mrf.mxu0
        %v2165 = vadd.f32 %v1956, %v2164
        %2166 = vmatmul.f32.gmra.mxu0 %v352
        %v2167 = vpop.f32.mrf.mxu0
        %v2168 = vadd.f32 %v1959, %v2167
        %2169 = vmatmul.f32.gmra.mxu0 %v355
        %v2170 = vpop.f32.mrf.mxu0
        %v2171 = vadd.f32 %v1962, %v2170
        %2172 = vmatmul.f32.gmra.mxu0 %v358
        %v2173 = vpop.f32.mrf.mxu0
        %v2174 = vadd.f32 %v1965, %v2173
        %2175 = vmatmul.f32.gmra.mxu0 %v361
        %v2176 = vpop.f32.mrf.mxu0
        %v2177 = vadd.f32 %v1968, %v2176
        %2178 = vmatmul.f32.gmra.mxu0 %v364
        %v2179 = vpop.f32.mrf.mxu0
        %v2180 = vadd.f32 %v1971, %v2179
        %2181 = vmatmul.f32.gmra.mxu0 %v367
        %v2182 = vpop.f32.mrf.mxu0
        %v2183 = vadd.f32 %v1974, %v2182
        %2184 = vmatmul.f32.gmra.mxu0 %v370
        %v2185 = vpop.f32.mrf.mxu0
        %v2186 = vadd.f32 %v1977, %v2185
        %2187 = vmatmul.f32.gmra.mxu0 %v373
        %v2188 = vpop.f32.mrf.mxu0
        %v2189 = vadd.f32 %v1980, %v2188
        %2190 = vmatmul.f32.gmra.mxu0 %v376
        %v2191 = vpop.f32.mrf.mxu0
        %v2192 = vadd.f32 %v1983, %v2191
        %2193 = vmatmul.f32.gmra.mxu0 %v379
        %v2194 = vpop.f32.mrf.mxu0
        %v2195 = vadd.f32 %v1986, %v2194
        %2196 = vmatmul.f32.gmra.mxu0 %v382
        %v2197 = vpop.f32.mrf.mxu0
        %v2198 = vadd.f32 %v1989, %v2197
        %2199 = vmatmul.f32.gmra.mxu0 %v385
        %v2200 = vpop.f32.mrf.mxu0
        %v2201 = vadd.f32 %v1992, %v2200
        %2202 = vmatmul.f32.gmra.mxu0 %v388
        %v2203 = vpop.f32.mrf.mxu0
        %v2204 = vadd.f32 %v1995, %v2203
        %2205 = vmatmul.f32.gmra.mxu0 %v391
        %v2206 = vpop.f32.mrf.mxu0
        %v2207 = vadd.f32 %v1998, %v2206
        %2208 = vmatmul.f32.gmra.mxu0 %v394
        %v2209 = vpop.f32.mrf.mxu0
        %v2210 = vadd.f32 %v2001, %v2209
        %2211 = vmatmul.f32.gmra.mxu0 %v397
        %v2212 = vpop.f32.mrf.mxu0
        %v2213 = vadd.f32 %v2004, %v2212
        %2214 = vmatmul.f32.gmra.mxu0 %v400
        %v2215 = vpop.f32.mrf.mxu0
        %v2216 = vadd.f32 %v2007, %v2215
        %2217 = vmatmul.f32.gmra.mxu0 %v403
        %v2218 = vpop.f32.mrf.mxu0
        %v2219 = vadd.f32 %v2010, %v2218
        %2220 = vmatmul.f32.gmra.mxu0 %v406
        %v2221 = vpop.f32.mrf.mxu0
        %v2222 = vadd.f32 %v2013, %v2221
        %2223 = vmatmul.f32.gmra.mxu0 %v409
        %v2224 = vpop.f32.mrf.mxu0
        %v2225 = vadd.f32 %v2016, %v2224
        %2226 = vmatmul.f32.gmra.mxu0 %v412
        %v2227 = vpop.f32.mrf.mxu0
        %v2228 = vadd.f32 %v2019, %v2227
        %2229 = vmatmul.f32.gmra.mxu0 %v415
        %v2230 = vpop.f32.mrf.mxu0
        %v2231 = vadd.f32 %v2022, %v2230
        %2232 = vdwg.mxu0
        %2233 = vmatpush.msra.mxu0 %v560
        %2234 = vmatpush.msra.mxu0 %v557
        %2235 = vmatpush.msra.mxu0 %v554
        %2236 = vmatpush.msra.mxu0 %v551
        %2237 = vmatpush.msra.mxu0 %v548
        %2238 = vmatpush.msra.mxu0 %v545
        %2239 = vmatpush.msra.mxu0 %v542
        %2240 = vmatpush.msra.mxu0 %v539
        %2241 = vmatpush.msra.mxu0 %v536
        %2242 = vmatpush.msra.mxu0 %v533
        %2243 = vmatpush.msra.mxu0 %v530
        %2244 = vmatpush.msra.mxu0 %v527
        %2245 = vmatpush.msra.mxu0 %v524
        %2246 = vmatpush.msra.mxu0 %v521
        %2247 = vmatpush.msra.mxu0 %v518
        %2248 = vmatpush.msra.mxu0 %v515
        %2249 = vmatmul.f32.gmra.mxu0 %v227
        %v2250 = vpop.f32.mrf.mxu0
        %v2251 = vadd.f32 %v2042, %v2250
        %2252 = vmatmul.f32.gmra.mxu0 %v230
        %v2253 = vpop.f32.mrf.mxu0
        %v2254 = vadd.f32 %v2045, %v2253
        %2255 = vmatmul.f32.gmra.mxu0 %v233
        %v2256 = vpop.f32.mrf.mxu0
        %v2257 = vadd.f32 %v2048, %v2256
        %2258 = vmatmul.f32.gmra.mxu0 %v236
        %v2259 = vpop.f32.mrf.mxu0
        %v2260 = vadd.f32 %v2051, %v2259
        %2261 = vmatmul.f32.gmra.mxu0 %v239
        %v2262 = vpop.f32.mrf.mxu0
        %v2263 = vadd.f32 %v2054, %v2262
        %2264 = vmatmul.f32.gmra.mxu0 %v242
        %v2265 = vpop.f32.mrf.mxu0
        %v2266 = vadd.f32 %v2057, %v2265
        %2267 = vmatmul.f32.gmra.mxu0 %v245
        %v2268 = vpop.f32.mrf.mxu0
        %v2269 = vadd.f32 %v2060, %v2268
        %2270 = vmatmul.f32.gmra.mxu0 %v248
        %v2271 = vpop.f32.mrf.mxu0
        %v2272 = vadd.f32 %v2063, %v2271
        %2273 = vmatmul.f32.gmra.mxu0 %v251
        %v2274 = vpop.f32.mrf.mxu0
        %v2275 = vadd.f32 %v2066, %v2274
        %2276 = vmatmul.f32.gmra.mxu0 %v254
        %v2277 = vpop.f32.mrf.mxu0
        %v2278 = vadd.f32 %v2069, %v2277
        %2279 = vmatmul.f32.gmra.mxu0 %v257
        %v2280 = vpop.f32.mrf.mxu0
        %v2281 = vadd.f32 %v2072, %v2280
        %2282 = vmatmul.f32.gmra.mxu0 %v260
        %v2283 = vpop.f32.mrf.mxu0
        %v2284 = vadd.f32 %v2075, %v2283
        %2285 = vmatmul.f32.gmra.mxu0 %v263
        %v2286 = vpop.f32.mrf.mxu0
        %v2287 = vadd.f32 %v2078, %v2286
        %2288 = vmatmul.f32.gmra.mxu0 %v266
        %v2289 = vpop.f32.mrf.mxu0
        %v2290 = vadd.f32 %v2081, %v2289
        %2291 = vmatmul.f32.gmra.mxu0 %v269
        %v2292 = vpop.f32.mrf.mxu0
        %v2293 = vadd.f32 %v2084, %v2292
        %2294 = vmatmul.f32.gmra.mxu0 %v272
        %v2295 = vpop.f32.mrf.mxu0
        %v2296 = vadd.f32 %v2087, %v2295
        %2297 = vmatmul.f32.gmra.mxu0 %v275
        %v2298 = vpop.f32.mrf.mxu0
        %v2299 = vadd.f32 %v2090, %v2298
        %2300 = vmatmul.f32.gmra.mxu0 %v278
        %v2301 = vpop.f32.mrf.mxu0
        %v2302 = vadd.f32 %v2093, %v2301
        %2303 = vmatmul.f32.gmra.mxu0 %v281
        %v2304 = vpop.f32.mrf.mxu0
        %v2305 = vadd.f32 %v2096, %v2304
        %2306 = vmatmul.f32.gmra.mxu0 %v284
        %v2307 = vpop.f32.mrf.mxu0
        %v2308 = vadd.f32 %v2099, %v2307
        %2309 = vmatmul.f32.gmra.mxu0 %v287
        %v2310 = vpop.f32.mrf.mxu0
        %v2311 = vadd.f32 %v2102, %v2310
        %2312 = vmatmul.f32.gmra.mxu0 %v290
        %v2313 = vpop.f32.mrf.mxu0
        %v2314 = vadd.f32 %v2105, %v2313
        %2315 = vmatmul.f32.gmra.mxu0 %v293
        %v2316 = vpop.f32.mrf.mxu0
        %v2317 = vadd.f32 %v2108, %v2316
        %2318 = vmatmul.f32.gmra.mxu0 %v296
        %v2319 = vpop.f32.mrf.mxu0
        %v2320 = vadd.f32 %v2111, %v2319
        %2321 = vmatmul.f32.gmra.mxu0 %v299
        %v2322 = vpop.f32.mrf.mxu0
        %v2323 = vadd.f32 %v2114, %v2322
        %2324 = vmatmul.f32.gmra.mxu0 %v302
        %v2325 = vpop.f32.mrf.mxu0
        %v2326 = vadd.f32 %v2117, %v2325
        %2327 = vmatmul.f32.gmra.mxu0 %v305
        %v2328 = vpop.f32.mrf.mxu0
        %v2329 = vadd.f32 %v2120, %v2328
        %2330 = vmatmul.f32.gmra.mxu0 %v308
        %v2331 = vpop.f32.mrf.mxu0
        %v2332 = vadd.f32 %v2123, %v2331
        %2333 = vmatmul.f32.gmra.mxu0 %v311
        %v2334 = vpop.f32.mrf.mxu0
        %v2335 = vadd.f32 %v2126, %v2334
        %2336 = vmatmul.f32.gmra.mxu0 %v314
        %v2337 = vpop.f32.mrf.mxu0
        %v2338 = vadd.f32 %v2129, %v2337
        %2339 = vmatmul.f32.gmra.mxu0 %v317
        %v2340 = vpop.f32.mrf.mxu0
        %v2341 = vadd.f32 %v2132, %v2340
        %2342 = vmatmul.f32.gmra.mxu0 %v320
        %v2343 = vpop.f32.mrf.mxu0
        %v2344 = vadd.f32 %v2135, %v2343
        %2345 = vmatmul.f32.gmra.mxu0 %v323
        %v2346 = vpop.f32.mrf.mxu0
        %v2347 = vadd.f32 %v2138, %v2346
        %2348 = vmatmul.f32.gmra.mxu0 %v326
        %v2349 = vpop.f32.mrf.mxu0
        %v2350 = vadd.f32 %v2141, %v2349
        %2351 = vmatmul.f32.gmra.mxu0 %v329
        %v2352 = vpop.f32.mrf.mxu0
        %v2353 = vadd.f32 %v2144, %v2352
        %2354 = vmatmul.f32.gmra.mxu0 %v332
        %v2355 = vpop.f32.mrf.mxu0
        %v2356 = vadd.f32 %v2147, %v2355
        %2357 = vmatmul.f32.gmra.mxu0 %v335
        %v2358 = vpop.f32.mrf.mxu0
        %v2359 = vadd.f32 %v2150, %v2358
        %2360 = vmatmul.f32.gmra.mxu0 %v338
        %v2361 = vpop.f32.mrf.mxu0
        %v2362 = vadd.f32 %v2153, %v2361
        %2363 = vmatmul.f32.gmra.mxu0 %v341
        %v2364 = vpop.f32.mrf.mxu0
        %v2365 = vadd.f32 %v2156, %v2364
        %2366 = vmatmul.f32.gmra.mxu0 %v344
        %v2367 = vpop.f32.mrf.mxu0
        %v2368 = vadd.f32 %v2159, %v2367
        %2369 = vmatmul.f32.gmra.mxu0 %v347
        %v2370 = vpop.f32.mrf.mxu0
        %v2371 = vadd.f32 %v2162, %v2370
        %2372 = vmatmul.f32.gmra.mxu0 %v350
        %v2373 = vpop.f32.mrf.mxu0
        %v2374 = vadd.f32 %v2165, %v2373
        %2375 = vmatmul.f32.gmra.mxu0 %v353
        %v2376 = vpop.f32.mrf.mxu0
        %v2377 = vadd.f32 %v2168, %v2376
        %2378 = vmatmul.f32.gmra.mxu0 %v356
        %v2379 = vpop.f32.mrf.mxu0
        %v2380 = vadd.f32 %v2171, %v2379
        %2381 = vmatmul.f32.gmra.mxu0 %v359
        %v2382 = vpop.f32.mrf.mxu0
        %v2383 = vadd.f32 %v2174, %v2382
        %2384 = vmatmul.f32.gmra.mxu0 %v362
        %v2385 = vpop.f32.mrf.mxu0
        %v2386 = vadd.f32 %v2177, %v2385
        %2387 = vmatmul.f32.gmra.mxu0 %v365
        %v2388 = vpop.f32.mrf.mxu0
        %v2389 = vadd.f32 %v2180, %v2388
        %2390 = vmatmul.f32.gmra.mxu0 %v368
        %v2391 = vpop.f32.mrf.mxu0
        %v2392 = vadd.f32 %v2183, %v2391
        %2393 = vmatmul.f32.gmra.mxu0 %v371
        %v2394 = vpop.f32.mrf.mxu0
        %v2395 = vadd.f32 %v2186, %v2394
        %2396 = vmatmul.f32.gmra.mxu0 %v374
        %v2397 = vpop.f32.mrf.mxu0
        %v2398 = vadd.f32 %v2189, %v2397
        %2399 = vmatmul.f32.gmra.mxu0 %v377
        %v2400 = vpop.f32.mrf.mxu0
        %v2401 = vadd.f32 %v2192, %v2400
        %2402 = vmatmul.f32.gmra.mxu0 %v380
        %v2403 = vpop.f32.mrf.mxu0
        %v2404 = vadd.f32 %v2195, %v2403
        %2405 = vmatmul.f32.gmra.mxu0 %v383
        %v2406 = vpop.f32.mrf.mxu0
        %v2407 = vadd.f32 %v2198, %v2406
        %2408 = vmatmul.f32.gmra.mxu0 %v386
        %v2409 = vpop.f32.mrf.mxu0
        %v2410 = vadd.f32 %v2201, %v2409
        %2411 = vmatmul.f32.gmra.mxu0 %v389
        %v2412 = vpop.f32.mrf.mxu0
        %v2413 = vadd.f32 %v2204, %v2412
        %2414 = vmatmul.f32.gmra.mxu0 %v392
        %v2415 = vpop.f32.mrf.mxu0
        %v2416 = vadd.f32 %v2207, %v2415
        %2417 = vmatmul.f32.gmra.mxu0 %v395
        %v2418 = vpop.f32.mrf.mxu0
        %v2419 = vadd.f32 %v2210, %v2418
        %2420 = vmatmul.f32.gmra.mxu0 %v398
        %v2421 = vpop.f32.mrf.mxu0
        %v2422 = vadd.f32 %v2213, %v2421
        %2423 = vmatmul.f32.gmra.mxu0 %v401
        %v2424 = vpop.f32.mrf.mxu0
        %v2425 = vadd.f32 %v2216, %v2424
        %2426 = vmatmul.f32.gmra.mxu0 %v404
        %v2427 = vpop.f32.mrf.mxu0
        %v2428 = vadd.f32 %v2219, %v2427
        %2429 = vmatmul.f32.gmra.mxu0 %v407
        %v2430 = vpop.f32.mrf.mxu0
        %v2431 = vadd.f32 %v2222, %v2430
        %2432 = vmatmul.f32.gmra.mxu0 %v410
        %v2433 = vpop.f32.mrf.mxu0
        %v2434 = vadd.f32 %v2225, %v2433
        %2435 = vmatmul.f32.gmra.mxu0 %v413
        %v2436 = vpop.f32.mrf.mxu0
        %v2437 = vadd.f32 %v2228, %v2436
        %2438 = vmatmul.f32.gmra.mxu0 %v416
        %v2439 = vpop.f32.mrf.mxu0
        %v2440 = vadd.f32 %v2231, %v2439
        %2441 = vdwg.mxu0
        %2442 = vst [vmem:[%s220] sm:$0xff] %v997
        %2443 = vst [vmem:[%s220 + $0x8] sm:$0xff] %v1624
        %2444 = vst [vmem:[%s220 + $0x10] sm:$0xff] %v2251
        %2445 = vst [vmem:[%s220 + $0x18] sm:$0xff] %v1000
        %2446 = vst [vmem:[%s220 + $0x20] sm:$0xff] %v1627
        %2447 = vst [vmem:[%s220 + $0x28] sm:$0xff] %v2254
        %2448 = vst [vmem:[%s220 + $0x30] sm:$0xff] %v1003
        %2449 = vst [vmem:[%s220 + $0x38] sm:$0xff] %v1630
        %2450 = vst [vmem:[%s220 + $0x40] sm:$0xff] %v2257
        %2451 = vst [vmem:[%s220 + $0x48] sm:$0xff] %v1006
        %2452 = vst [vmem:[%s220 + $0x50] sm:$0xff] %v1633
        %2453 = vst [vmem:[%s220 + $0x58] sm:$0xff] %v2260
        %2454 = vst [vmem:[%s220 + $0x60] sm:$0xff] %v1009
        %2455 = vst [vmem:[%s220 + $0x68] sm:$0xff] %v1636
        %2456 = vst [vmem:[%s220 + $0x70] sm:$0xff] %v2263
        %2457 = vst [vmem:[%s220 + $0x78] sm:$0xff] %v1012
        %2458 = vst [vmem:[%s220 + $0x80] sm:$0xff] %v1639
        %2459 = vst [vmem:[%s220 + $0x88] sm:$0xff] %v2266
        %2460 = vst [vmem:[%s220 + $0x90] sm:$0xff] %v1015
        %2461 = vst [vmem:[%s220 + $0x98] sm:$0xff] %v1642
        %2462 = vst [vmem:[%s220 + $0xa0] sm:$0xff] %v2269
        %2463 = vst [vmem:[%s220 + $0xa8] sm:$0xff] %v1018
        %2464 = vst [vmem:[%s220 + $0xb0] sm:$0xff] %v1645
        %2465 = vst [vmem:[%s220 + $0xb8] sm:$0xff] %v2272
        %2466 = vst [vmem:[%s220 + $0xc0] sm:$0xff] %v1021
        %2467 = vst [vmem:[%s220 + $0xc8] sm:$0xff] %v1648
        %2468 = vst [vmem:[%s220 + $0xd0] sm:$0xff] %v2275
        %2469 = vst [vmem:[%s220 + $0xd8] sm:$0xff] %v1024
        %2470 = vst [vmem:[%s220 + $0xe0] sm:$0xff] %v1651
        %2471 = vst [vmem:[%s220 + $0xe8] sm:$0xff] %v2278
        %2472 = vst [vmem:[%s220 + $0xf0] sm:$0xff] %v1027
        %2473 = vst [vmem:[%s220 + $0xf8] sm:$0xff] %v1654
        %2474 = vst [vmem:[%s220 + $0x100] sm:$0xff] %v2281
        %2475 = vst [vmem:[%s220 + $0x108] sm:$0xff] %v1030
        %2476 = vst [vmem:[%s220 + $0x110] sm:$0xff] %v1657
        %2477 = vst [vmem:[%s220 + $0x118] sm:$0xff] %v2284
        %2478 = vst [vmem:[%s220 + $0x120] sm:$0xff] %v1033
        %2479 = vst [vmem:[%s220 + $0x128] sm:$0xff] %v1660
        %2480 = vst [vmem:[%s220 + $0x130] sm:$0xff] %v2287
        %2481 = vst [vmem:[%s220 + $0x138] sm:$0xff] %v1036
        %2482 = vst [vmem:[%s220 + $0x140] sm:$0xff] %v1663
        %2483 = vst [vmem:[%s220 + $0x148] sm:$0xff] %v2290
        %2484 = vst [vmem:[%s220 + $0x150] sm:$0xff] %v1039
        %2485 = vst [vmem:[%s220 + $0x158] sm:$0xff] %v1666
        %2486 = vst [vmem:[%s220 + $0x160] sm:$0xff] %v2293
        %2487 = vst [vmem:[%s220 + $0x168] sm:$0xff] %v1042
        %2488 = vst [vmem:[%s220 + $0x170] sm:$0xff] %v1669
        %2489 = vst [vmem:[%s220 + $0x178] sm:$0xff] %v2296
        %2490 = vst [vmem:[%s220 + $0x180] sm:$0xff] %v1045
        %2491 = vst [vmem:[%s220 + $0x188] sm:$0xff] %v1672
        %2492 = vst [vmem:[%s220 + $0x190] sm:$0xff] %v2299
        %2493 = vst [vmem:[%s220 + $0x198] sm:$0xff] %v1048
        %2494 = vst [vmem:[%s220 + $0x1a0] sm:$0xff] %v1675
        %2495 = vst [vmem:[%s220 + $0x1a8] sm:$0xff] %v2302
        %2496 = vst [vmem:[%s220 + $0x1b0] sm:$0xff] %v1051
        %2497 = vst [vmem:[%s220 + $0x1b8] sm:$0xff] %v1678
        %2498 = vst [vmem:[%s220 + $0x1c0] sm:$0xff] %v2305
        %2499 = vst [vmem:[%s220 + $0x1c8] sm:$0xff] %v1054
        %2500 = vst [vmem:[%s220 + $0x1d0] sm:$0xff] %v1681
        %2501 = vst [vmem:[%s220 + $0x1d8] sm:$0xff] %v2308
        %2502 = vst [vmem:[%s220 + $0x1e0] sm:$0xff] %v1057
        %2503 = vst [vmem:[%s220 + $0x1e8] sm:$0xff] %v1684
        %2504 = vst [vmem:[%s220 + $0x1f0] sm:$0xff] %v2311
        %2505 = vst [vmem:[%s220 + $0x1f8] sm:$0xff] %v1060
        %2506 = vst [vmem:[%s220 + $0x200] sm:$0xff] %v1687
        %2507 = vst [vmem:[%s220 + $0x208] sm:$0xff] %v2314
        %2508 = vst [vmem:[%s220 + $0x210] sm:$0xff] %v1063
        %2509 = vst [vmem:[%s220 + $0x218] sm:$0xff] %v1690
        %2510 = vst [vmem:[%s220 + $0x220] sm:$0xff] %v2317
        %2511 = vst [vmem:[%s220 + $0x228] sm:$0xff] %v1066
        %2512 = vst [vmem:[%s220 + $0x230] sm:$0xff] %v1693
        %2513 = vst [vmem:[%s220 + $0x238] sm:$0xff] %v2320
        %2514 = vst [vmem:[%s220 + $0x240] sm:$0xff] %v1069
        %2515 = vst [vmem:[%s220 + $0x248] sm:$0xff] %v1696
        %2516 = vst [vmem:[%s220 + $0x250] sm:$0xff] %v2323
        %2517 = vst [vmem:[%s220 + $0x258] sm:$0xff] %v1072
        %2518 = vst [vmem:[%s220 + $0x260] sm:$0xff] %v1699
        %2519 = vst [vmem:[%s220 + $0x268] sm:$0xff] %v2326
        %2520 = vst [vmem:[%s220 + $0x270] sm:$0xff] %v1075
        %2521 = vst [vmem:[%s220 + $0x278] sm:$0xff] %v1702
        %2522 = vst [vmem:[%s220 + $0x280] sm:$0xff] %v2329
        %2523 = vst [vmem:[%s220 + $0x288] sm:$0xff] %v1078
        %2524 = vst [vmem:[%s220 + $0x290] sm:$0xff] %v1705
        %2525 = vst [vmem:[%s220 + $0x298] sm:$0xff] %v2332
        %2526 = vst [vmem:[%s220 + $0x2a0] sm:$0xff] %v1081
        %2527 = vst [vmem:[%s220 + $0x2a8] sm:$0xff] %v1708
        %2528 = vst [vmem:[%s220 + $0x2b0] sm:$0xff] %v2335
        %2529 = vst [vmem:[%s220 + $0x2b8] sm:$0xff] %v1084
        %2530 = vst [vmem:[%s220 + $0x2c0] sm:$0xff] %v1711
        %2531 = vst [vmem:[%s220 + $0x2c8] sm:$0xff] %v2338
        %2532 = vst [vmem:[%s220 + $0x2d0] sm:$0xff] %v1087
        %2533 = vst [vmem:[%s220 + $0x2d8] sm:$0xff] %v1714
        %2534 = vst [vmem:[%s220 + $0x2e0] sm:$0xff] %v2341
        %2535 = vst [vmem:[%s220 + $0x2e8] sm:$0xff] %v1090
        %2536 = vst [vmem:[%s220 + $0x2f0] sm:$0xff] %v1717
        %2537 = vst [vmem:[%s220 + $0x2f8] sm:$0xff] %v2344
        %2538 = vst [vmem:[%s220 + $0x300] sm:$0xff] %v1093
        %2539 = vst [vmem:[%s220 + $0x308] sm:$0xff] %v1720
        %2540 = vst [vmem:[%s220 + $0x310] sm:$0xff] %v2347
        %2541 = vst [vmem:[%s220 + $0x318] sm:$0xff] %v1096
        %2542 = vst [vmem:[%s220 + $0x320] sm:$0xff] %v1723
        %2543 = vst [vmem:[%s220 + $0x328] sm:$0xff] %v2350
        %2544 = vst [vmem:[%s220 + $0x330] sm:$0xff] %v1099
        %2545 = vst [vmem:[%s220 + $0x338] sm:$0xff] %v1726
        %2546 = vst [vmem:[%s220 + $0x340] sm:$0xff] %v2353
        %2547 = vst [vmem:[%s220 + $0x348] sm:$0xff] %v1102
        %2548 = vst [vmem:[%s220 + $0x350] sm:$0xff] %v1729
        %2549 = vst [vmem:[%s220 + $0x358] sm:$0xff] %v2356
        %2550 = vst [vmem:[%s220 + $0x360] sm:$0xff] %v1105
        %2551 = vst [vmem:[%s220 + $0x368] sm:$0xff] %v1732
        %2552 = vst [vmem:[%s220 + $0x370] sm:$0xff] %v2359
        %2553 = vst [vmem:[%s220 + $0x378] sm:$0xff] %v1108
        %2554 = vst [vmem:[%s220 + $0x380] sm:$0xff] %v1735
        %2555 = vst [vmem:[%s220 + $0x388] sm:$0xff] %v2362
        %2556 = vst [vmem:[%s220 + $0x390] sm:$0xff] %v1111
        %2557 = vst [vmem:[%s220 + $0x398] sm:$0xff] %v1738
        %2558 = vst [vmem:[%s220 + $0x3a0] sm:$0xff] %v2365
        %2559 = vst [vmem:[%s220 + $0x3a8] sm:$0xff] %v1114
        %2560 = vst [vmem:[%s220 + $0x3b0] sm:$0xff] %v1741
        %2561 = vst [vmem:[%s220 + $0x3b8] sm:$0xff] %v2368
        %2562 = vst [vmem:[%s220 + $0x3c0] sm:$0xff] %v1117
        %2563 = vst [vmem:[%s220 + $0x3c8] sm:$0xff] %v1744
        %2564 = vst [vmem:[%s220 + $0x3d0] sm:$0xff] %v2371
        %2565 = vst [vmem:[%s220 + $0x3d8] sm:$0xff] %v1120
        %2566 = vst [vmem:[%s220 + $0x3e0] sm:$0xff] %v1747
        %2567 = vst [vmem:[%s220 + $0x3e8] sm:$0xff] %v2374
        %2568 = vst [vmem:[%s220 + $0x3f0] sm:$0xff] %v1123
        %2569 = vst [vmem:[%s220 + $0x3f8] sm:$0xff] %v1750
        %2570 = vst [vmem:[%s220 + $0x400] sm:$0xff] %v2377
        %2571 = vst [vmem:[%s220 + $0x408] sm:$0xff] %v1126
        %2572 = vst [vmem:[%s220 + $0x410] sm:$0xff] %v1753
        %2573 = vst [vmem:[%s220 + $0x418] sm:$0xff] %v2380
        %2574 = vst [vmem:[%s220 + $0x420] sm:$0xff] %v1129
        %2575 = vst [vmem:[%s220 + $0x428] sm:$0xff] %v1756
        %2576 = vst [vmem:[%s220 + $0x430] sm:$0xff] %v2383
        %2577 = vst [vmem:[%s220 + $0x438] sm:$0xff] %v1132
        %2578 = vst [vmem:[%s220 + $0x440] sm:$0xff] %v1759
        %2579 = vst [vmem:[%s220 + $0x448] sm:$0xff] %v2386
        %2580 = vst [vmem:[%s220 + $0x450] sm:$0xff] %v1135
        %2581 = vst [vmem:[%s220 + $0x458] sm:$0xff] %v1762
        %2582 = vst [vmem:[%s220 + $0x460] sm:$0xff] %v2389
        %2583 = vst [vmem:[%s220 + $0x468] sm:$0xff] %v1138
        %2584 = vst [vmem:[%s220 + $0x470] sm:$0xff] %v1765
        %2585 = vst [vmem:[%s220 + $0x478] sm:$0xff] %v2392
        %2586 = vst [vmem:[%s220 + $0x480] sm:$0xff] %v1141
        %2587 = vst [vmem:[%s220 + $0x488] sm:$0xff] %v1768
        %2588 = vst [vmem:[%s220 + $0x490] sm:$0xff] %v2395
        %2589 = vst [vmem:[%s220 + $0x498] sm:$0xff] %v1144
        %2590 = vst [vmem:[%s220 + $0x4a0] sm:$0xff] %v1771
        %2591 = vst [vmem:[%s220 + $0x4a8] sm:$0xff] %v2398
        %2592 = vst [vmem:[%s220 + $0x4b0] sm:$0xff] %v1147
        %2593 = vst [vmem:[%s220 + $0x4b8] sm:$0xff] %v1774
        %2594 = vst [vmem:[%s220 + $0x4c0] sm:$0xff] %v2401
        %2595 = vst [vmem:[%s220 + $0x4c8] sm:$0xff] %v1150
        %2596 = vst [vmem:[%s220 + $0x4d0] sm:$0xff] %v1777
        %2597 = vst [vmem:[%s220 + $0x4d8] sm:$0xff] %v2404
        %2598 = vst [vmem:[%s220 + $0x4e0] sm:$0xff] %v1153
        %2599 = vst [vmem:[%s220 + $0x4e8] sm:$0xff] %v1780
        %2600 = vst [vmem:[%s220 + $0x4f0] sm:$0xff] %v2407
        %2601 = vst [vmem:[%s220 + $0x4f8] sm:$0xff] %v1156
        %2602 = vst [vmem:[%s220 + $0x500] sm:$0xff] %v1783
        %2603 = vst [vmem:[%s220 + $0x508] sm:$0xff] %v2410
        %2604 = vst [vmem:[%s220 + $0x510] sm:$0xff] %v1159
        %2605 = vst [vmem:[%s220 + $0x518] sm:$0xff] %v1786
        %2606 = vst [vmem:[%s220 + $0x520] sm:$0xff] %v2413
        %2607 = vst [vmem:[%s220 + $0x528] sm:$0xff] %v1162
        %2608 = vst [vmem:[%s220 + $0x530] sm:$0xff] %v1789
        %2609 = vst [vmem:[%s220 + $0x538] sm:$0xff] %v2416
        %2610 = vst [vmem:[%s220 + $0x540] sm:$0xff] %v1165
        %2611 = vst [vmem:[%s220 + $0x548] sm:$0xff] %v1792
        %2612 = vst [vmem:[%s220 + $0x550] sm:$0xff] %v2419
        %2613 = vst [vmem:[%s220 + $0x558] sm:$0xff] %v1168
        %2614 = vst [vmem:[%s220 + $0x560] sm:$0xff] %v1795
        %2615 = vst [vmem:[%s220 + $0x568] sm:$0xff] %v2422
        %2616 = vst [vmem:[%s220 + $0x570] sm:$0xff] %v1171
        %2617 = vst [vmem:[%s220 + $0x578] sm:$0xff] %v1798
        %2618 = vst [vmem:[%s220 + $0x580] sm:$0xff] %v2425
        %2619 = vst [vmem:[%s220 + $0x588] sm:$0xff] %v1174
        %2620 = vst [vmem:[%s220 + $0x590] sm:$0xff] %v1801
        %2621 = vst [vmem:[%s220 + $0x598] sm:$0xff] %v2428
        %2622 = vst [vmem:[%s220 + $0x5a0] sm:$0xff] %v1177
        %2623 = vst [vmem:[%s220 + $0x5a8] sm:$0xff] %v1804
        %2624 = vst [vmem:[%s220 + $0x5b0] sm:$0xff] %v2431
        %2625 = vst [vmem:[%s220 + $0x5b8] sm:$0xff] %v1180
        %2626 = vst [vmem:[%s220 + $0x5c0] sm:$0xff] %v1807
        %2627 = vst [vmem:[%s220 + $0x5c8] sm:$0xff] %v2434
        %2628 = vst [vmem:[%s220 + $0x5d0] sm:$0xff] %v1183
        %2629 = vst [vmem:[%s220 + $0x5d8] sm:$0xff] %v1810
        %2630 = vst [vmem:[%s220 + $0x5e0] sm:$0xff] %v2437
        %2631 = vst [vmem:[%s220 + $0x5e8] sm:$0xff] %v1186
        %2632 = vst [vmem:[%s220 + $0x5f0] sm:$0xff] %v1813
        %2633 = vst [vmem:[%s220 + $0x5f8] sm:$0xff] %v2440
        %s2634 = sand.u32 %s96, 1
        %s2635 = scalar_lea.sflag [#allocation4], %s2634
        %s2636 = sand.u32 %s96, 1
        %s2637 = smul.addr %s2636, 1536
        %s2638 = scalar_lea.vmem [#allocation7], %s2637
        // Predicated region
        $region37: #{tpu_custom_call.1} parent=27 // pred_check
          %p2639 = pneg %p106
        $region38: #{tpu_custom_call.1} parent=27 // pred_check_branch
          %2641 = sbr.rel (%p2639) target = $region40
        $region39: #{tpu_custom_call.1} parent=27 // pred_region
          %s2642 = smul.u32 64, %s26
          %s2643 = smul.u32 3, %s27
          %2645 = vsyncadd %s2635, 0
          %s2646 = smul.addr %s2642, 9
          %s2647 = sadd.s32 %s2643, %s2646
          %s2648 = smul.addr %s2647, 8
          %s2649 = scalar_lea.hbm %s2, %s2648
          %s2650 = sshll.u32 %s2638, 4
          %s2651 = int_to_ptr.vmem [resolvable:$true] %s2650
          %s2652 = sshll.u32 %s2649, 4
          %s2653 = int_to_ptr.hbm [resolvable:$true] %s2652
          %2658 = dma.vmem_to_hbm [thread:$0]  %s2651, 24576, %s2653, %s2635, 384, 1152, 24
        $region40: #{tpu_custom_call.1} parent=27 // pred_fallthru
          _
      $region28: #{tpu_custom_call.1} parent=5 // pred_fallthru
        _
      %p2659 = scmp.le.s32.totalorder 2, %s17
      // Predicated region
      $region41: #{tpu_custom_call.1} parent=5 // pred_check
        %p2660 = pneg %p2659
      $region42: #{tpu_custom_call.1} parent=5 // pred_check_branch
        %2662 = sbr.rel (%p2660) target = $region44
      $region43: #{tpu_custom_call.1} parent=5 // pred_region
        %s2663 = ssub.s32 %s17, 2
        // Predicated region
        $region45: #{tpu_custom_call.1} parent=43 // pred_check
          %p2664 = pneg %p112
        $region46: #{tpu_custom_call.1} parent=43 // pred_check_branch
          %2666 = sbr.rel (%p2664) target = $region48
        $region47: #{tpu_custom_call.1} parent=43 // pred_region
          %s2667 = sand.u32 %s97, 1
          %s2668 = scalar_lea.sflag [#allocation4], %s2667
          %s2669 = sand.u32 %s97, 1
          %s2670 = smul.addr %s2669, 1536
          %s2671 = scalar_lea.vmem [#allocation7], %s2670
          %2673 = dma.done %s2668, 24576
        $region48: #{tpu_custom_call.1} parent=43 // pred_fallthru
          _
      $region44: #{tpu_custom_call.1} parent=5 // pred_fallthru
        _
    $region6: #{tpu_custom_call.1} parent=1 // loop_footer
      %s21 = sadd.s32 1, %s17
    $region7: #{tpu_custom_call.1} parent=1 // loop_footer_branch
      %16 = sbr.rel target = $region3
    $region8: #{tpu_custom_call.1} parent=1 // loop_exit
      _
    %2674 = vsyncpa [#allocation3], 1
    %s2675 = scalar_lea.sflag [#allocation3], 1
    %2676 = vsyncpa %s2675, 1
    %2677 = vsyncpa [#allocation6], 1
    %s2678 = scalar_lea.sflag [#allocation6], 1
    %2679 = vsyncpa %s2678, 1
    %2680 = vsyncpa [#allocation4], 1
    %s2681 = scalar_lea.sflag [#allocation4], 1
    %2682 = vsyncpa %s2681, 1

</llo_original>
